<compile_context>
chip_gen: v5e
topology: v5e:2x2
jax: 0.10.0
libtpu: 0.0.40
codegen_flags: <defaults>
</compile_context>

<pallas_src>
import math
import functools

import jax
import jax.numpy as jnp
from jax import lax
from jax.experimental import pallas as pl
from jax.experimental.pallas import tpu as pltpu

LN_EPS = 1e-8
CDT = jnp.bfloat16      # matmul-input dtype; accumulation is always f32


def _ln(x, g, b):
    mu = jnp.mean(x, axis=-1, keepdims=True)
    var = jnp.mean((x - mu) ** 2, axis=-1, keepdims=True)
    return (x - mu) * lax.rsqrt(var + LN_EPS) * g + b


# ----------------------------------------------------------------------------
# One fused kernel: NB transformer blocks -> last LayerNorm -> project_k_interest
# -> per-interest logits -> non-adaptive reductions (sum over K for pos/neg,
# max over K of pos-fdbk).  One grid step processes BT batch rows at once.
# ----------------------------------------------------------------------------
def _sine_kernel(seqs_ref, tl_ref, ln1g_ref, ln1b_ref, wq_ref, wk_ref, wv_ref,
                 wfc_ref, ln2g_ref, ln2b_ref, c1w_ref, c1b_ref, c2w_ref, c2b_ref,
                 lnfg_ref, lnfb_ref, int_ref, cand_ref, out_ref,
                 *, n_heads, num_interest, num_blocks, bt, seq_len):
    T = seq_len
    M = bt * T
    x = seqs_ref[0]            # (M, D) f32: BT sequences flattened row-major
    tl = tl_ref[0]             # (M, 1) timeline keep-mask (1 = keep)
    D = x.shape[-1]
    dk = D // n_heads
    scale = jnp.float32(1.0 / math.sqrt(dk))

    # (T, T) causal mask shared by every sequence in the tile.  Diagonal is always
    # allowed, so no row is fully masked (no NaNs from exp(-inf) on a whole row).
    row = lax.broadcasted_iota(jnp.int32, (T, T), 0)
    col = lax.broadcasted_iota(jnp.int32, (T, T), 1)
    mask_tt = jnp.where(col <= row, jnp.float32(0.0), jnp.float32(-jnp.inf))

    for blk in range(num_blocks):                      # static unroll over blocks
        # Q = attention_layernorm(seqs); K, V use raw seqs (matches PyTorch code)
        q_in = _ln(x, ln1g_ref[blk], ln1b_ref[blk])    # f32
        x_b = x.astype(CDT)
        q = jnp.dot(q_in.astype(CDT), wq_ref[blk], preferred_element_type=jnp.float32)
        k = jnp.dot(x_b, wk_ref[blk], preferred_element_type=jnp.float32)
        v = jnp.dot(x_b, wv_ref[blk], preferred_element_type=jnp.float32)

        # Per-sequence attention: softmax only over live (bt, T, T) entries.
        q3 = q.astype(CDT).reshape(bt, T, D)
        k3 = k.astype(CDT).reshape(bt, T, D)
        v3 = v.astype(CDT).reshape(bt, T, D)
        heads = []
        for h in range(n_heads):                       # static unroll over heads
            sl = slice(h * dk, (h + 1) * dk)
            s = jnp.einsum('bqd,bkd->bqk', q3[:, :, sl], k3[:, :, sl],
                           preferred_element_type=jnp.float32) * scale + mask_tt
            m = jnp.max(s, axis=-1, keepdims=True)
            e = jnp.exp(s - m)
            p = e * pl.reciprocal(jnp.sum(e, axis=-1, keepdims=True), approx=True)
            heads.append(jnp.einsum('bqk,bkd->bqd', p.astype(CDT), v3[:, :, sl],
                                    preferred_element_type=jnp.float32))
        attn = jnp.concatenate(heads, axis=-1).reshape(M, D)     # (M, D) f32
        # single full-depth output projection (one (M,D)@(D,D) MXU matmul)
        attn_out = jnp.dot(attn.astype(CDT), wfc_ref[blk],
                           preferred_element_type=jnp.float32)

        x2 = q_in + attn_out                           # seqs = Q + mha_outputs
        y = _ln(x2, ln2g_ref[blk], ln2b_ref[blk])      # forward layernorm
        h1 = jnp.maximum(
            jnp.dot(y.astype(CDT), c1w_ref[blk], preferred_element_type=jnp.float32)
            + c1b_ref[blk], 0.0)
        h2 = jnp.dot(h1.astype(CDT), c2w_ref[blk],
                     preferred_element_type=jnp.float32) + c2b_ref[blk]
        x = (h2 + y) * tl                              # FFN residual, timeline mask

    # --- last LayerNorm + project_k_interest + logits + non-adaptive reductions ---
    feats = _ln(x, lnfg_ref[...], lnfb_ref[...])       # (M, D) f32
    pos_e = cand_ref[0, 0].astype(jnp.float32)         # (M, D)
    neg_e = cand_ref[1, 0].astype(jnp.float32)
    fdbk_e = cand_ref[2, 0].astype(jnp.float32)

    pos_sum = jnp.zeros((M, 1), jnp.float32)
    neg_sum = jnp.zeros((M, 1), jnp.float32)
    diff_max = jnp.full((M, 1), -jnp.inf, jnp.float32)
    for kk in range(num_interest):                     # static unroll over interests
        ik = int_ref[kk:kk + 1, :]                     # (1, D)
        proj = feats + jax.nn.sigmoid(feats * ik) * feats
        p_l = jnp.sum(proj * pos_e, axis=-1, keepdims=True)
        n_l = jnp.sum(proj * neg_e, axis=-1, keepdims=True)
        f_l = jnp.sum(proj * fdbk_e, axis=-1, keepdims=True)
        pos_sum = pos_sum + p_l
        neg_sum = neg_sum + n_l
        diff_max = jnp.maximum(diff_max, p_l - f_l)

    # single stacked output: (M, 3) = [pos_sum | neg_sum | max(pos-fdbk)]
    out_ref[0] = jnp.concatenate([pos_sum, neg_sum, diff_max], axis=-1)


def _choose_bt(B, T, cap_rows=256):
    """Largest divisor of B with bt*T <= cap_rows while keeping G = B // bt >= 2
    (so the "parallel" grid axis shards across v7x's two TensorCores and the
    seqs/cand input DMAs can double-buffer against compute)."""
    bt = 1
    for c in range(1, B + 1):
        if B % c != 0 or c * T > cap_rows:
            continue
        if B // c >= 2 or B == 1:
            bt = c
    return bt


# ----------------------------------------------------------------------------
# Glue: embedding gathers / weight stacking in plain JAX, hot path in one kernel.
# ----------------------------------------------------------------------------
def sine_forward(params, log_seqs, pos_seqs, neg_seqs, neg_feedback, *,
                 n_heads, num_interest):
    item = params["item_emb"]
    B, T = log_seqs.shape
    D = item.shape[1]
    NB = len(params["blocks"])
    K = num_interest
    assert D % n_heads == 0

    seqs = item[log_seqs] * jnp.float32(D) ** 0.5 + params["pos_emb"][None]
    tl = (log_seqs != 0).astype(jnp.float32)[..., None]          # (B, T, 1)
    seqs = seqs * tl
    # stacked pos/neg/feedback candidate embeddings, streamed in bf16
    cand = jnp.stack([item[pos_seqs], item[neg_seqs], item[neg_feedback]],
                     axis=0).astype(CDT)

    bt = _choose_bt(B, T)
    assert B % bt == 0
    G = B // bt
    M = bt * T

    # flatten BT rows per grid step on the host side
    seqs_g = seqs.reshape(G, M, D)
    tl_g = tl.reshape(G, M, 1)
    cand_g = cand.reshape(3, G, M, D)

    stack = lambda name, dt=jnp.float32: jnp.stack(
        [blk[name] for blk in params["blocks"]], axis=0).astype(dt)
    ln1g, ln1b = stack("ln1_g"), stack("ln1_b")
    wq, wk, wv = stack("wq", CDT), stack("wk", CDT), stack("wv", CDT)
    wfc = stack("wfc", CDT)
    ln2g, ln2b = stack("ln2_g"), stack("ln2_b")
    c1w, c1b = stack("c1w", CDT), stack("c1b")
    c2w, c2b = stack("c2w", CDT), stack("c2b")

    per_g3 = lambda g: (g, 0, 0)
    cst3 = lambda g: (0, 0, 0)
    cst2 = lambda g: (0, 0)

    # explicit scoped-VMEM limit: resident weights + 2x streamed blocks, 4x headroom
    wbytes = NB * 6 * D * D * 2 + NB * 6 * D * 4 + (2 + K) * D * 4
    sbytes = 2 * (M * D * 4 + M * 4 + 3 * M * D * 2 + M * 3 * 4)
    vmem_limit = int(min(64 << 20, max(32 << 20, 4 * (wbytes + sbytes))))

    logits = pl.pallas_call(
        functools.partial(_sine_kernel, n_heads=n_heads, num_interest=K,
                          num_blocks=NB, bt=bt, seq_len=T),
        out_shape=jax.ShapeDtypeStruct((G, M, 3), jnp.float32),
        grid=(G,),
        in_specs=[
            pl.BlockSpec((1, M, D), per_g3),                     # seqs (BT rows)
            pl.BlockSpec((1, M, 1), per_g3),                     # timeline mask
            pl.BlockSpec((NB, 1, D), cst3), pl.BlockSpec((NB, 1, D), cst3),   # ln1 g/b
            pl.BlockSpec((NB, D, D), cst3),                      # wq
            pl.BlockSpec((NB, D, D), cst3),                      # wk
            pl.BlockSpec((NB, D, D), cst3),                      # wv
            pl.BlockSpec((NB, D, D), cst3),                      # wfc
            pl.BlockSpec((NB, 1, D), cst3), pl.BlockSpec((NB, 1, D), cst3),   # ln2 g/b
            pl.BlockSpec((NB, D, D), cst3), pl.BlockSpec((NB, 1, D), cst3),   # conv1 w/b
            pl.BlockSpec((NB, D, D), cst3), pl.BlockSpec((NB, 1, D), cst3),   # conv2 w/b
            pl.BlockSpec((1, D), cst2), pl.BlockSpec((1, D), cst2),           # last LN g/b
            pl.BlockSpec((K, D), cst2),                          # interest embedding
            pl.BlockSpec((3, 1, M, D), lambda g: (0, g, 0, 0)),  # pos|neg|fdbk embs
        ],
        out_specs=pl.BlockSpec((1, M, 3), per_g3),
        compiler_params=pltpu.CompilerParams(
            dimension_semantics=("parallel",),
            vmem_limit_bytes=vmem_limit),
    )(seqs_g, tl_g, ln1g, ln1b, wq, wk, wv, wfc, ln2g, ln2b,
      c1w, c1b, c2w, c2b, params["lnf_g"], params["lnf_b"],
      params["interest_emb"], cand_g)

    logits = logits.reshape(B, T, 3)
    return logits[..., 0], logits[..., 1], logits[..., 2]


# Pure-JAX f32 reference (mirrors the PyTorch forward in eval mode, filter=0,
# adaptive=False)
def ref_forward(params, log_seqs, pos_seqs, neg_seqs, neg_feedback, *,
                n_heads, num_interest):
    item = params["item_emb"]
    B, T = log_seqs.shape
    D = item.shape[1]
    dk = D // n_heads
    seqs = item[log_seqs] * jnp.float32(D) ** 0.5 + params["pos_emb"][None]
    tl = (log_seqs != 0).astype(jnp.float32)[..., None]
    seqs = seqs * tl
    row = jnp.arange(T)[:, None]
    col = jnp.arange(T)[None, :]
    mask_add = jnp.where(col > row, -jnp.inf, 0.0).astype(jnp.float32)
    for blk in params["blocks"]:
        q_in = _ln(seqs, blk["ln1_g"], blk["ln1_b"])
        q = q_in @ blk["wq"]
        k = seqs @ blk["wk"]
        v = seqs @ blk["wv"]
        qh = q.reshape(B, T, n_heads, dk).transpose(0, 2, 1, 3)
        kh = k.reshape(B, T, n_heads, dk).transpose(0, 2, 1, 3)
        vh = v.reshape(B, T, n_heads, dk).transpose(0, 2, 1, 3)
        s = jnp.einsum("bhqd,bhkd->bhqk", qh, kh) / math.sqrt(dk) + mask_add
        p = jax.nn.softmax(s, axis=-1)
        o = jnp.einsum("bhqk,bhkd->bhqd", p, vh).transpose(0, 2, 1, 3).reshape(B, T, D)
        o = o @ blk["wfc"]
        x2 = q_in + o
        y = _ln(x2, blk["ln2_g"], blk["ln2_b"])
        h1 = jax.nn.relu(y @ blk["c1w"] + blk["c1b"])
        h2 = h1 @ blk["c2w"] + blk["c2b"]
        seqs = (h2 + y) * tl
    feats = _ln(seqs, params["lnf_g"], params["lnf_b"])
    inter = params["interest_emb"]
    proj = feats[None] + jax.nn.sigmoid(feats[None] * inter[:, None, None, :]) * feats[None]
    pos_e = item[pos_seqs]
    neg_e = item[neg_seqs]
    fdbk_e = item[neg_feedback]
    pos_l = (proj * pos_e[None]).sum(-1)
    neg_l = (proj * neg_e[None]).sum(-1)
    fdbk_l = (proj * fdbk_e[None]).sum(-1)
    return pos_l.sum(0), neg_l.sum(0), (pos_l - fdbk_l).max(0)


def init_params(key, item_num, max_len, hidden, num_interest, num_blocks):
    ks = iter(jax.random.split(key, 16 + 8 * num_blocks))

    def nrm(shape, scale=0.1):
        return scale * jax.random.normal(next(ks), shape, jnp.float32)

    item_emb = nrm((item_num + 1, hidden)).at[0].set(0.0)   # padding_idx=0 row is zero
    params = {
        "item_emb": item_emb,
        "pos_emb": nrm((max_len, hidden)),
        "interest_emb": nrm((num_interest, hidden)),
        "lnf_g": jnp.ones((1, hidden), jnp.float32),
        "lnf_b": jnp.zeros((1, hidden), jnp.float32),
        "blocks": [],
    }
    for _ in range(num_blocks):
        params["blocks"].append({
            "ln1_g": jnp.ones((1, hidden), jnp.float32),
            "ln1_b": jnp.zeros((1, hidden), jnp.float32),
            "wq": nrm((hidden, hidden)), "wk": nrm((hidden, hidden)),
            "wv": nrm((hidden, hidden)), "wfc": nrm((hidden, hidden)),
            "ln2_g": jnp.ones((1, hidden), jnp.float32),
            "ln2_b": jnp.zeros((1, hidden), jnp.float32),
            "c1w": nrm((hidden, hidden)), "c1b": nrm((1, hidden)),
            "c2w": nrm((hidden, hidden)), "c2b": nrm((1, hidden)),
        })
    return params


if __name__ == "__main__":
    B, T, D, H, K, NB = 2, 8, 32, 2, 4, 2
    ITEM_NUM = 50

    root = jax.random.PRNGKey(0)
    k_param, k1, k2, k3, k4 = jax.random.split(root, 5)
    params = init_params(k_param, ITEM_NUM, T, D, K, NB)

    log_seqs = jax.random.randint(k1, (B, T), 0, ITEM_NUM + 1, dtype=jnp.int32)
    pos_seqs = jax.random.randint(k2, (B, T), 1, ITEM_NUM + 1, dtype=jnp.int32)
    neg_seqs = jax.random.randint(k3, (B, T), 1, ITEM_NUM + 1, dtype=jnp.int32)
    neg_feedback = jax.random.randint(k4, (B, T), 0, ITEM_NUM + 1, dtype=jnp.int32)

    out = sine_forward(params, log_seqs, pos_seqs, neg_seqs, neg_feedback,
                       n_heads=H, num_interest=K)
    out = jax.block_until_ready(out)

    ref = ref_forward(params, log_seqs, pos_seqs, neg_seqs, neg_feedback,
                      n_heads=H, num_interest=K)
    # tolerance loosened vs. the f32 reference because matmul inputs are bf16
    # (accumulation stays f32 via preferred_element_type)
    for a, b in zip(out, ref):
        assert a.shape == b.shape
        assert jnp.allclose(a, b, rtol=5e-2, atol=5e-2)

    print("KERNEL_OK")
</pallas_src>

<mosaic_0001>
module attributes {stable_mosaic.version = 11 : i64} {
  func.func @_sine_kernel(%arg0: i32, %arg1: memref<1x8x32xf32, #tpu.memory_space<vmem>>, %arg2: memref<1x8x1xf32, #tpu.memory_space<vmem>>, %arg3: memref<2x1x32xf32, #tpu.memory_space<vmem>>, %arg4: memref<2x1x32xf32, #tpu.memory_space<vmem>>, %arg5: memref<2x32x32xbf16, #tpu.memory_space<vmem>>, %arg6: memref<2x32x32xbf16, #tpu.memory_space<vmem>>, %arg7: memref<2x32x32xbf16, #tpu.memory_space<vmem>>, %arg8: memref<2x32x32xbf16, #tpu.memory_space<vmem>>, %arg9: memref<2x1x32xf32, #tpu.memory_space<vmem>>, %arg10: memref<2x1x32xf32, #tpu.memory_space<vmem>>, %arg11: memref<2x32x32xbf16, #tpu.memory_space<vmem>>, %arg12: memref<2x1x32xf32, #tpu.memory_space<vmem>>, %arg13: memref<2x32x32xbf16, #tpu.memory_space<vmem>>, %arg14: memref<2x1x32xf32, #tpu.memory_space<vmem>>, %arg15: memref<1x32xf32, #tpu.memory_space<vmem>>, %arg16: memref<1x32xf32, #tpu.memory_space<vmem>>, %arg17: memref<4x32xf32, #tpu.memory_space<vmem>>, %arg18: memref<3x1x8x32xbf16, #tpu.memory_space<vmem>>, %arg19: memref<1x8x3xf32, #tpu.memory_space<vmem>>) attributes {dimension_semantics = [#tpu.dimension_semantics<parallel>], iteration_bounds = array<i64: 2>, scalar_prefetch = 0 : i64, scratch_operands = 0 : i64, tpu.core_type = #tpu.core_type<tc>, window_params = [{transform_indices = @transform_0, window_bounds = array<i64: 1, 8, 32>}, {transform_indices = @transform_1, window_bounds = array<i64: 1, 8, 1>}, {pipeline_mode = #tpu.pipeline_mode<synchronous>, transform_indices = @transform_2, window_bounds = array<i64: 2, 1, 32>}, {pipeline_mode = #tpu.pipeline_mode<synchronous>, transform_indices = @transform_3, window_bounds = array<i64: 2, 1, 32>}, {pipeline_mode = #tpu.pipeline_mode<synchronous>, transform_indices = @transform_4, window_bounds = array<i64: 2, 32, 32>}, {pipeline_mode = #tpu.pipeline_mode<synchronous>, transform_indices = @transform_5, window_bounds = array<i64: 2, 32, 32>}, {pipeline_mode = #tpu.pipeline_mode<synchronous>, transform_indices = @transform_6, window_bounds = array<i64: 2, 32, 32>}, {pipeline_mode = #tpu.pipeline_mode<synchronous>, transform_indices = @transform_7, window_bounds = array<i64: 2, 32, 32>}, {pipeline_mode = #tpu.pipeline_mode<synchronous>, transform_indices = @transform_8, window_bounds = array<i64: 2, 1, 32>}, {pipeline_mode = #tpu.pipeline_mode<synchronous>, transform_indices = @transform_9, window_bounds = array<i64: 2, 1, 32>}, {pipeline_mode = #tpu.pipeline_mode<synchronous>, transform_indices = @transform_10, window_bounds = array<i64: 2, 32, 32>}, {pipeline_mode = #tpu.pipeline_mode<synchronous>, transform_indices = @transform_11, window_bounds = array<i64: 2, 1, 32>}, {pipeline_mode = #tpu.pipeline_mode<synchronous>, transform_indices = @transform_12, window_bounds = array<i64: 2, 32, 32>}, {pipeline_mode = #tpu.pipeline_mode<synchronous>, transform_indices = @transform_13, window_bounds = array<i64: 2, 1, 32>}, {pipeline_mode = #tpu.pipeline_mode<synchronous>, transform_indices = @transform_14, window_bounds = array<i64: 1, 32>}, {pipeline_mode = #tpu.pipeline_mode<synchronous>, transform_indices = @transform_15, window_bounds = array<i64: 1, 32>}, {pipeline_mode = #tpu.pipeline_mode<synchronous>, transform_indices = @transform_16, window_bounds = array<i64: 4, 32>}, {transform_indices = @transform_17, window_bounds = array<i64: 3, 1, 8, 32>}, {transform_indices = @transform_18, window_bounds = array<i64: 1, 8, 3>}]} {
    %c0 = arith.constant 0 : index
    %c0_0 = arith.constant 0 : index
    %c0_1 = arith.constant 0 : index
    %0 = vector.load %arg1[%c0, %c0_0, %c0_1] : memref<1x8x32xf32, #tpu.memory_space<vmem>>, vector<1x8x32xf32>
    %1 = vector.shape_cast %0 : vector<1x8x32xf32> to vector<8x32xf32>
    %c0_2 = arith.constant 0 : index
    %c0_3 = arith.constant 0 : index
    %c0_4 = arith.constant 0 : index
    %2 = vector.load %arg2[%c0_2, %c0_3, %c0_4] : memref<1x8x1xf32, #tpu.memory_space<vmem>>, vector<1x8x1xf32>
    %3 = vector.shape_cast %2 : vector<1x8x1xf32> to vector<8x1xf32>
    %4 = tpu.iota {dimensions = array<i32: 0>} : vector<8x8xi32>
    %5 = tpu.iota {dimensions = array<i32: 1>} : vector<8x8xi32>
    %6 = arith.cmpi sle, %5, %4 : vector<8x8xi32>
    %cst = arith.constant 0.000000e+00 : f32
    %cst_5 = arith.constant 0xFF800000 : f32
    %7 = vector.broadcast %cst : f32 to vector<8x8xf32>
    %8 = vector.broadcast %cst_5 : f32 to vector<8x8xf32>
    %9 = arith.select %6, %7, %8 : vector<8x8xi1>, vector<8x8xf32>
    %c0_6 = arith.constant 0 : index
    %c0_7 = arith.constant 0 : index
    %c0_8 = arith.constant 0 : index
    %10 = vector.load %arg3[%c0_6, %c0_7, %c0_8] : memref<2x1x32xf32, #tpu.memory_space<vmem>>, vector<1x1x32xf32>
    %11 = vector.shape_cast %10 : vector<1x1x32xf32> to vector<1x32xf32>
    %c0_9 = arith.constant 0 : index
    %c0_10 = arith.constant 0 : index
    %c0_11 = arith.constant 0 : index
    %12 = vector.load %arg4[%c0_9, %c0_10, %c0_11] : memref<2x1x32xf32, #tpu.memory_space<vmem>>, vector<1x1x32xf32>
    %13 = vector.shape_cast %12 : vector<1x1x32xf32> to vector<1x32xf32>
    %cst_12 = arith.constant dense<0.000000e+00> : vector<8xf32>
    %14 = vector.multi_reduction <add>, %1, %cst_12 [1] : vector<8x32xf32> to vector<8xf32>
    %15 = vector.shape_cast %14 : vector<8xf32> to vector<8x1xf32>
    %cst_13 = arith.constant 3.200000e+01 : f32
    %16 = vector.broadcast %cst_13 : f32 to vector<8x1xf32>
    %17 = arith.divf %15, %16 : vector<8x1xf32>
    %18 = vector.broadcast %17 : vector<8x1xf32> to vector<8x32xf32>
    %19 = arith.subf %1, %18 : vector<8x32xf32>
    %20 = arith.mulf %19, %19 : vector<8x32xf32>
    %cst_14 = arith.constant dense<0.000000e+00> : vector<8xf32>
    %21 = vector.multi_reduction <add>, %20, %cst_14 [1] : vector<8x32xf32> to vector<8xf32>
    %22 = vector.shape_cast %21 : vector<8xf32> to vector<8x1xf32>
    %cst_15 = arith.constant 3.200000e+01 : f32
    %23 = vector.broadcast %cst_15 : f32 to vector<8x1xf32>
    %24 = arith.divf %22, %23 : vector<8x1xf32>
    %25 = vector.broadcast %17 : vector<8x1xf32> to vector<8x32xf32>
    %26 = arith.subf %1, %25 : vector<8x32xf32>
    %cst_16 = arith.constant 9.99999993E-9 : f32
    %27 = vector.broadcast %cst_16 : f32 to vector<8x1xf32>
    %28 = arith.addf %24, %27 : vector<8x1xf32>
    %29 = math.rsqrt %28 : vector<8x1xf32>
    %30 = vector.broadcast %29 : vector<8x1xf32> to vector<8x32xf32>
    %31 = arith.mulf %26, %30 : vector<8x32xf32>
    %32 = vector.broadcast %11 : vector<1x32xf32> to vector<8x32xf32>
    %33 = arith.mulf %31, %32 : vector<8x32xf32>
    %34 = vector.broadcast %13 : vector<1x32xf32> to vector<8x32xf32>
    %35 = arith.addf %33, %34 : vector<8x32xf32>
    %36 = arith.truncf %1 : vector<8x32xf32> to vector<8x32xbf16>
    %37 = arith.truncf %35 : vector<8x32xf32> to vector<8x32xbf16>
    %c0_17 = arith.constant 0 : index
    %c0_18 = arith.constant 0 : index
    %c0_19 = arith.constant 0 : index
    %38 = vector.load %arg5[%c0_17, %c0_18, %c0_19] : memref<2x32x32xbf16, #tpu.memory_space<vmem>>, vector<1x32x32xbf16>
    %39 = vector.shape_cast %38 : vector<1x32x32xbf16> to vector<32x32xbf16>
    %cst_20 = arith.constant dense<0.000000e+00> : vector<8x32xf32>
    %40 = tpu.matmul %37, %39, %cst_20 {dimension_numbers = #tpu.dot_dimension_numbers<[1], [0], [0], [1], [0, 0, 1, 1], [], []>} : vector<8x32xbf16>, vector<32x32xbf16>, vector<8x32xf32> -> vector<8x32xf32>
    %c0_21 = arith.constant 0 : index
    %c0_22 = arith.constant 0 : index
    %c0_23 = arith.constant 0 : index
    %41 = vector.load %arg6[%c0_21, %c0_22, %c0_23] : memref<2x32x32xbf16, #tpu.memory_space<vmem>>, vector<1x32x32xbf16>
    %42 = vector.shape_cast %41 : vector<1x32x32xbf16> to vector<32x32xbf16>
    %cst_24 = arith.constant dense<0.000000e+00> : vector<8x32xf32>
    %43 = tpu.matmul %36, %42, %cst_24 {dimension_numbers = #tpu.dot_dimension_numbers<[1], [0], [0], [1], [0, 0, 1, 1], [], []>} : vector<8x32xbf16>, vector<32x32xbf16>, vector<8x32xf32> -> vector<8x32xf32>
    %c0_25 = arith.constant 0 : index
    %c0_26 = arith.constant 0 : index
    %c0_27 = arith.constant 0 : index
    %44 = vector.load %arg7[%c0_25, %c0_26, %c0_27] : memref<2x32x32xbf16, #tpu.memory_space<vmem>>, vector<1x32x32xbf16>
    %45 = vector.shape_cast %44 : vector<1x32x32xbf16> to vector<32x32xbf16>
    %cst_28 = arith.constant dense<0.000000e+00> : vector<8x32xf32>
    %46 = tpu.matmul %36, %45, %cst_28 {dimension_numbers = #tpu.dot_dimension_numbers<[1], [0], [0], [1], [0, 0, 1, 1], [], []>} : vector<8x32xbf16>, vector<32x32xbf16>, vector<8x32xf32> -> vector<8x32xf32>
    %47 = arith.truncf %40 : vector<8x32xf32> to vector<8x32xbf16>
    %48 = vector.shape_cast %47 : vector<8x32xbf16> to vector<1x8x32xbf16>
    %49 = arith.truncf %43 : vector<8x32xf32> to vector<8x32xbf16>
    %50 = vector.shape_cast %49 : vector<8x32xbf16> to vector<1x8x32xbf16>
    %51 = arith.truncf %46 : vector<8x32xf32> to vector<8x32xbf16>
    %52 = vector.shape_cast %51 : vector<8x32xbf16> to vector<1x8x32xbf16>
    %53 = vector.extract_strided_slice %48 {offsets = [0, 0, 0], sizes = [1, 8, 16], strides = [1, 1, 1]} : vector<1x8x32xbf16> to vector<1x8x16xbf16>
    %54 = vector.extract_strided_slice %50 {offsets = [0, 0, 0], sizes = [1, 8, 16], strides = [1, 1, 1]} : vector<1x8x32xbf16> to vector<1x8x16xbf16>
    "tpu.trace_start"() <{level = 10 : i32, message = "bqd,bkd->bqk"}> : () -> ()
    %cst_29 = arith.constant dense<0.000000e+00> : vector<1x8x8xf32>
    %55 = tpu.matmul %53, %54, %cst_29 {dimension_numbers = #tpu.dot_dimension_numbers<[2], [2], [1], [1], [0, 0, 0, 1, 1, 1], [0], [0]>} : vector<1x8x16xbf16>, vector<1x8x16xbf16>, vector<1x8x8xf32> -> vector<1x8x8xf32>
    "tpu.trace_stop"() : () -> ()
    %cst_30 = arith.constant 2.500000e-01 : f32
    %56 = vector.broadcast %cst_30 : f32 to vector<1x8x8xf32>
    %57 = arith.mulf %55, %56 : vector<1x8x8xf32>
    %58 = vector.shape_cast %9 : vector<8x8xf32> to vector<1x8x8xf32>
    %59 = arith.addf %57, %58 : vector<1x8x8xf32>
    %cst_31 = arith.constant dense<0xFF800000> : vector<1x8xf32>
    %60 = vector.multi_reduction <maximumf>, %59, %cst_31 [2] : vector<1x8x8xf32> to vector<1x8xf32>
    %61 = vector.shape_cast %60 : vector<1x8xf32> to vector<1x8x1xf32>
    %62 = vector.broadcast %61 : vector<1x8x1xf32> to vector<1x8x8xf32>
    %63 = arith.subf %59, %62 : vector<1x8x8xf32>
    %64 = math.exp %63 : vector<1x8x8xf32>
    %cst_32 = arith.constant dense<0.000000e+00> : vector<1x8xf32>
    %65 = vector.multi_reduction <add>, %64, %cst_32 [2] : vector<1x8x8xf32> to vector<1x8xf32>
    %66 = vector.shape_cast %65 : vector<1x8xf32> to vector<1x8x1xf32>
    %67 = tpu.reciprocal %66 {approx = true} : vector<1x8x1xf32> -> vector<1x8x1xf32>
    %68 = vector.broadcast %67 : vector<1x8x1xf32> to vector<1x8x8xf32>
    %69 = arith.mulf %64, %68 : vector<1x8x8xf32>
    %70 = arith.truncf %69 : vector<1x8x8xf32> to vector<1x8x8xbf16>
    %71 = vector.extract_strided_slice %52 {offsets = [0, 0, 0], sizes = [1, 8, 16], strides = [1, 1, 1]} : vector<1x8x32xbf16> to vector<1x8x16xbf16>
    "tpu.trace_start"() <{level = 10 : i32, message = "bqk,bkd->bqd"}> : () -> ()
    %cst_33 = arith.constant dense<0.000000e+00> : vector<1x8x16xf32>
    %72 = tpu.matmul %70, %71, %cst_33 {dimension_numbers = #tpu.dot_dimension_numbers<[2], [1], [1], [2], [0, 0, 0, 1, 1, 2], [0], [0]>} : vector<1x8x8xbf16>, vector<1x8x16xbf16>, vector<1x8x16xf32> -> vector<1x8x16xf32>
    "tpu.trace_stop"() : () -> ()
    %73 = vector.extract_strided_slice %48 {offsets = [0, 0, 16], sizes = [1, 8, 16], strides = [1, 1, 1]} : vector<1x8x32xbf16> to vector<1x8x16xbf16>
    %74 = vector.extract_strided_slice %50 {offsets = [0, 0, 16], sizes = [1, 8, 16], strides = [1, 1, 1]} : vector<1x8x32xbf16> to vector<1x8x16xbf16>
    "tpu.trace_start"() <{level = 10 : i32, message = "bqd,bkd->bqk"}> : () -> ()
    %cst_34 = arith.constant dense<0.000000e+00> : vector<1x8x8xf32>
    %75 = tpu.matmul %73, %74, %cst_34 {dimension_numbers = #tpu.dot_dimension_numbers<[2], [2], [1], [1], [0, 0, 0, 1, 1, 1], [0], [0]>} : vector<1x8x16xbf16>, vector<1x8x16xbf16>, vector<1x8x8xf32> -> vector<1x8x8xf32>
    "tpu.trace_stop"() : () -> ()
    %cst_35 = arith.constant 2.500000e-01 : f32
    %76 = vector.broadcast %cst_35 : f32 to vector<1x8x8xf32>
    %77 = arith.mulf %75, %76 : vector<1x8x8xf32>
    %78 = vector.shape_cast %9 : vector<8x8xf32> to vector<1x8x8xf32>
    %79 = arith.addf %77, %78 : vector<1x8x8xf32>
    %cst_36 = arith.constant dense<0xFF800000> : vector<1x8xf32>
    %80 = vector.multi_reduction <maximumf>, %79, %cst_36 [2] : vector<1x8x8xf32> to vector<1x8xf32>
    %81 = vector.shape_cast %80 : vector<1x8xf32> to vector<1x8x1xf32>
    %82 = vector.broadcast %81 : vector<1x8x1xf32> to vector<1x8x8xf32>
    %83 = arith.subf %79, %82 : vector<1x8x8xf32>
    %84 = math.exp %83 : vector<1x8x8xf32>
    %cst_37 = arith.constant dense<0.000000e+00> : vector<1x8xf32>
    %85 = vector.multi_reduction <add>, %84, %cst_37 [2] : vector<1x8x8xf32> to vector<1x8xf32>
    %86 = vector.shape_cast %85 : vector<1x8xf32> to vector<1x8x1xf32>
    %87 = tpu.reciprocal %86 {approx = true} : vector<1x8x1xf32> -> vector<1x8x1xf32>
    %88 = vector.broadcast %87 : vector<1x8x1xf32> to vector<1x8x8xf32>
    %89 = arith.mulf %84, %88 : vector<1x8x8xf32>
    %90 = arith.truncf %89 : vector<1x8x8xf32> to vector<1x8x8xbf16>
    %91 = vector.extract_strided_slice %52 {offsets = [0, 0, 16], sizes = [1, 8, 16], strides = [1, 1, 1]} : vector<1x8x32xbf16> to vector<1x8x16xbf16>
    "tpu.trace_start"() <{level = 10 : i32, message = "bqk,bkd->bqd"}> : () -> ()
    %cst_38 = arith.constant dense<0.000000e+00> : vector<1x8x16xf32>
    %92 = tpu.matmul %90, %91, %cst_38 {dimension_numbers = #tpu.dot_dimension_numbers<[2], [1], [1], [2], [0, 0, 0, 1, 1, 2], [0], [0]>} : vector<1x8x8xbf16>, vector<1x8x16xbf16>, vector<1x8x16xf32> -> vector<1x8x16xf32>
    "tpu.trace_stop"() : () -> ()
    %93 = tpu.concatenate %72, %92 in 2 : vector<1x8x16xf32>, vector<1x8x16xf32> -> vector<1x8x32xf32>
    %94 = vector.shape_cast %93 : vector<1x8x32xf32> to vector<8x32xf32>
    %95 = arith.truncf %94 : vector<8x32xf32> to vector<8x32xbf16>
    %c0_39 = arith.constant 0 : index
    %c0_40 = arith.constant 0 : index
    %c0_41 = arith.constant 0 : index
    %96 = vector.load %arg8[%c0_39, %c0_40, %c0_41] : memref<2x32x32xbf16, #tpu.memory_space<vmem>>, vector<1x32x32xbf16>
    %97 = vector.shape_cast %96 : vector<1x32x32xbf16> to vector<32x32xbf16>
    %cst_42 = arith.constant dense<0.000000e+00> : vector<8x32xf32>
    %98 = tpu.matmul %95, %97, %cst_42 {dimension_numbers = #tpu.dot_dimension_numbers<[1], [0], [0], [1], [0, 0, 1, 1], [], []>} : vector<8x32xbf16>, vector<32x32xbf16>, vector<8x32xf32> -> vector<8x32xf32>
    %99 = arith.addf %35, %98 : vector<8x32xf32>
    %c0_43 = arith.constant 0 : index
    %c0_44 = arith.constant 0 : index
    %c0_45 = arith.constant 0 : index
    %100 = vector.load %arg9[%c0_43, %c0_44, %c0_45] : memref<2x1x32xf32, #tpu.memory_space<vmem>>, vector<1x1x32xf32>
    %101 = vector.shape_cast %100 : vector<1x1x32xf32> to vector<1x32xf32>
    %c0_46 = arith.constant 0 : index
    %c0_47 = arith.constant 0 : index
    %c0_48 = arith.constant 0 : index
    %102 = vector.load %arg10[%c0_46, %c0_47, %c0_48] : memref<2x1x32xf32, #tpu.memory_space<vmem>>, vector<1x1x32xf32>
    %103 = vector.shape_cast %102 : vector<1x1x32xf32> to vector<1x32xf32>
    %cst_49 = arith.constant dense<0.000000e+00> : vector<8xf32>
    %104 = vector.multi_reduction <add>, %99, %cst_49 [1] : vector<8x32xf32> to vector<8xf32>
    %105 = vector.shape_cast %104 : vector<8xf32> to vector<8x1xf32>
    %cst_50 = arith.constant 3.200000e+01 : f32
    %106 = vector.broadcast %cst_50 : f32 to vector<8x1xf32>
    %107 = arith.divf %105, %106 : vector<8x1xf32>
    %108 = vector.broadcast %107 : vector<8x1xf32> to vector<8x32xf32>
    %109 = arith.subf %99, %108 : vector<8x32xf32>
    %110 = arith.mulf %109, %109 : vector<8x32xf32>
    %cst_51 = arith.constant dense<0.000000e+00> : vector<8xf32>
    %111 = vector.multi_reduction <add>, %110, %cst_51 [1] : vector<8x32xf32> to vector<8xf32>
    %112 = vector.shape_cast %111 : vector<8xf32> to vector<8x1xf32>
    %cst_52 = arith.constant 3.200000e+01 : f32
    %113 = vector.broadcast %cst_52 : f32 to vector<8x1xf32>
    %114 = arith.divf %112, %113 : vector<8x1xf32>
    %115 = vector.broadcast %107 : vector<8x1xf32> to vector<8x32xf32>
    %116 = arith.subf %99, %115 : vector<8x32xf32>
    %cst_53 = arith.constant 9.99999993E-9 : f32
    %117 = vector.broadcast %cst_53 : f32 to vector<8x1xf32>
    %118 = arith.addf %114, %117 : vector<8x1xf32>
    %119 = math.rsqrt %118 : vector<8x1xf32>
    %120 = vector.broadcast %119 : vector<8x1xf32> to vector<8x32xf32>
    %121 = arith.mulf %116, %120 : vector<8x32xf32>
    %122 = vector.broadcast %101 : vector<1x32xf32> to vector<8x32xf32>
    %123 = arith.mulf %121, %122 : vector<8x32xf32>
    %124 = vector.broadcast %103 : vector<1x32xf32> to vector<8x32xf32>
    %125 = arith.addf %123, %124 : vector<8x32xf32>
    %126 = arith.truncf %125 : vector<8x32xf32> to vector<8x32xbf16>
    %c0_54 = arith.constant 0 : index
    %c0_55 = arith.constant 0 : index
    %c0_56 = arith.constant 0 : index
    %127 = vector.load %arg11[%c0_54, %c0_55, %c0_56] : memref<2x32x32xbf16, #tpu.memory_space<vmem>>, vector<1x32x32xbf16>
    %128 = vector.shape_cast %127 : vector<1x32x32xbf16> to vector<32x32xbf16>
    %cst_57 = arith.constant dense<0.000000e+00> : vector<8x32xf32>
    %129 = tpu.matmul %126, %128, %cst_57 {dimension_numbers = #tpu.dot_dimension_numbers<[1], [0], [0], [1], [0, 0, 1, 1], [], []>} : vector<8x32xbf16>, vector<32x32xbf16>, vector<8x32xf32> -> vector<8x32xf32>
    %c0_58 = arith.constant 0 : index
    %c0_59 = arith.constant 0 : index
    %c0_60 = arith.constant 0 : index
    %130 = vector.load %arg12[%c0_58, %c0_59, %c0_60] : memref<2x1x32xf32, #tpu.memory_space<vmem>>, vector<1x1x32xf32>
    %131 = vector.shape_cast %130 : vector<1x1x32xf32> to vector<1x32xf32>
    %132 = vector.broadcast %131 : vector<1x32xf32> to vector<8x32xf32>
    %133 = arith.addf %129, %132 : vector<8x32xf32>
    %cst_61 = arith.constant 0.000000e+00 : f32
    %134 = vector.broadcast %cst_61 : f32 to vector<8x32xf32>
    %135 = arith.maximumf %133, %134 : vector<8x32xf32>
    %136 = arith.truncf %135 : vector<8x32xf32> to vector<8x32xbf16>
    %c0_62 = arith.constant 0 : index
    %c0_63 = arith.constant 0 : index
    %c0_64 = arith.constant 0 : index
    %137 = vector.load %arg13[%c0_62, %c0_63, %c0_64] : memref<2x32x32xbf16, #tpu.memory_space<vmem>>, vector<1x32x32xbf16>
    %138 = vector.shape_cast %137 : vector<1x32x32xbf16> to vector<32x32xbf16>
    %cst_65 = arith.constant dense<0.000000e+00> : vector<8x32xf32>
    %139 = tpu.matmul %136, %138, %cst_65 {dimension_numbers = #tpu.dot_dimension_numbers<[1], [0], [0], [1], [0, 0, 1, 1], [], []>} : vector<8x32xbf16>, vector<32x32xbf16>, vector<8x32xf32> -> vector<8x32xf32>
    %c0_66 = arith.constant 0 : index
    %c0_67 = arith.constant 0 : index
    %c0_68 = arith.constant 0 : index
    %140 = vector.load %arg14[%c0_66, %c0_67, %c0_68] : memref<2x1x32xf32, #tpu.memory_space<vmem>>, vector<1x1x32xf32>
    %141 = vector.shape_cast %140 : vector<1x1x32xf32> to vector<1x32xf32>
    %142 = vector.broadcast %141 : vector<1x32xf32> to vector<8x32xf32>
    %143 = arith.addf %139, %142 : vector<8x32xf32>
    %144 = arith.addf %143, %125 : vector<8x32xf32>
    %145 = vector.broadcast %3 : vector<8x1xf32> to vector<8x32xf32>
    %146 = arith.mulf %144, %145 : vector<8x32xf32>
    %c1 = arith.constant 1 : index
    %c0_69 = arith.constant 0 : index
    %c0_70 = arith.constant 0 : index
    %147 = vector.load %arg3[%c1, %c0_69, %c0_70] : memref<2x1x32xf32, #tpu.memory_space<vmem>>, vector<1x1x32xf32>
    %148 = vector.shape_cast %147 : vector<1x1x32xf32> to vector<1x32xf32>
    %c1_71 = arith.constant 1 : index
    %c0_72 = arith.constant 0 : index
    %c0_73 = arith.constant 0 : index
    %149 = vector.load %arg4[%c1_71, %c0_72, %c0_73] : memref<2x1x32xf32, #tpu.memory_space<vmem>>, vector<1x1x32xf32>
    %150 = vector.shape_cast %149 : vector<1x1x32xf32> to vector<1x32xf32>
    %cst_74 = arith.constant dense<0.000000e+00> : vector<8xf32>
    %151 = vector.multi_reduction <add>, %146, %cst_74 [1] : vector<8x32xf32> to vector<8xf32>
    %152 = vector.shape_cast %151 : vector<8xf32> to vector<8x1xf32>
    %cst_75 = arith.constant 3.200000e+01 : f32
    %153 = vector.broadcast %cst_75 : f32 to vector<8x1xf32>
    %154 = arith.divf %152, %153 : vector<8x1xf32>
    %155 = vector.broadcast %154 : vector<8x1xf32> to vector<8x32xf32>
    %156 = arith.subf %146, %155 : vector<8x32xf32>
    %157 = arith.mulf %156, %156 : vector<8x32xf32>
    %cst_76 = arith.constant dense<0.000000e+00> : vector<8xf32>
    %158 = vector.multi_reduction <add>, %157, %cst_76 [1] : vector<8x32xf32> to vector<8xf32>
    %159 = vector.shape_cast %158 : vector<8xf32> to vector<8x1xf32>
    %cst_77 = arith.constant 3.200000e+01 : f32
    %160 = vector.broadcast %cst_77 : f32 to vector<8x1xf32>
    %161 = arith.divf %159, %160 : vector<8x1xf32>
    %162 = vector.broadcast %154 : vector<8x1xf32> to vector<8x32xf32>
    %163 = arith.subf %146, %162 : vector<8x32xf32>
    %cst_78 = arith.constant 9.99999993E-9 : f32
    %164 = vector.broadcast %cst_78 : f32 to vector<8x1xf32>
    %165 = arith.addf %161, %164 : vector<8x1xf32>
    %166 = math.rsqrt %165 : vector<8x1xf32>
    %167 = vector.broadcast %166 : vector<8x1xf32> to vector<8x32xf32>
    %168 = arith.mulf %163, %167 : vector<8x32xf32>
    %169 = vector.broadcast %148 : vector<1x32xf32> to vector<8x32xf32>
    %170 = arith.mulf %168, %169 : vector<8x32xf32>
    %171 = vector.broadcast %150 : vector<1x32xf32> to vector<8x32xf32>
    %172 = arith.addf %170, %171 : vector<8x32xf32>
    %173 = arith.truncf %146 : vector<8x32xf32> to vector<8x32xbf16>
    %174 = arith.truncf %172 : vector<8x32xf32> to vector<8x32xbf16>
    %c1_79 = arith.constant 1 : index
    %c0_80 = arith.constant 0 : index
    %c0_81 = arith.constant 0 : index
    %175 = vector.load %arg5[%c1_79, %c0_80, %c0_81] : memref<2x32x32xbf16, #tpu.memory_space<vmem>>, vector<1x32x32xbf16>
    %176 = vector.shape_cast %175 : vector<1x32x32xbf16> to vector<32x32xbf16>
    %cst_82 = arith.constant dense<0.000000e+00> : vector<8x32xf32>
    %177 = tpu.matmul %174, %176, %cst_82 {dimension_numbers = #tpu.dot_dimension_numbers<[1], [0], [0], [1], [0, 0, 1, 1], [], []>} : vector<8x32xbf16>, vector<32x32xbf16>, vector<8x32xf32> -> vector<8x32xf32>
    %c1_83 = arith.constant 1 : index
    %c0_84 = arith.constant 0 : index
    %c0_85 = arith.constant 0 : index
    %178 = vector.load %arg6[%c1_83, %c0_84, %c0_85] : memref<2x32x32xbf16, #tpu.memory_space<vmem>>, vector<1x32x32xbf16>
    %179 = vector.shape_cast %178 : vector<1x32x32xbf16> to vector<32x32xbf16>
    %cst_86 = arith.constant dense<0.000000e+00> : vector<8x32xf32>
    %180 = tpu.matmul %173, %179, %cst_86 {dimension_numbers = #tpu.dot_dimension_numbers<[1], [0], [0], [1], [0, 0, 1, 1], [], []>} : vector<8x32xbf16>, vector<32x32xbf16>, vector<8x32xf32> -> vector<8x32xf32>
    %c1_87 = arith.constant 1 : index
    %c0_88 = arith.constant 0 : index
    %c0_89 = arith.constant 0 : index
    %181 = vector.load %arg7[%c1_87, %c0_88, %c0_89] : memref<2x32x32xbf16, #tpu.memory_space<vmem>>, vector<1x32x32xbf16>
    %182 = vector.shape_cast %181 : vector<1x32x32xbf16> to vector<32x32xbf16>
    %cst_90 = arith.constant dense<0.000000e+00> : vector<8x32xf32>
    %183 = tpu.matmul %173, %182, %cst_90 {dimension_numbers = #tpu.dot_dimension_numbers<[1], [0], [0], [1], [0, 0, 1, 1], [], []>} : vector<8x32xbf16>, vector<32x32xbf16>, vector<8x32xf32> -> vector<8x32xf32>
    %184 = arith.truncf %177 : vector<8x32xf32> to vector<8x32xbf16>
    %185 = vector.shape_cast %184 : vector<8x32xbf16> to vector<1x8x32xbf16>
    %186 = arith.truncf %180 : vector<8x32xf32> to vector<8x32xbf16>
    %187 = vector.shape_cast %186 : vector<8x32xbf16> to vector<1x8x32xbf16>
    %188 = arith.truncf %183 : vector<8x32xf32> to vector<8x32xbf16>
    %189 = vector.shape_cast %188 : vector<8x32xbf16> to vector<1x8x32xbf16>
    %190 = vector.extract_strided_slice %185 {offsets = [0, 0, 0], sizes = [1, 8, 16], strides = [1, 1, 1]} : vector<1x8x32xbf16> to vector<1x8x16xbf16>
    %191 = vector.extract_strided_slice %187 {offsets = [0, 0, 0], sizes = [1, 8, 16], strides = [1, 1, 1]} : vector<1x8x32xbf16> to vector<1x8x16xbf16>
    "tpu.trace_start"() <{level = 10 : i32, message = "bqd,bkd->bqk"}> : () -> ()
    %cst_91 = arith.constant dense<0.000000e+00> : vector<1x8x8xf32>
    %192 = tpu.matmul %190, %191, %cst_91 {dimension_numbers = #tpu.dot_dimension_numbers<[2], [2], [1], [1], [0, 0, 0, 1, 1, 1], [0], [0]>} : vector<1x8x16xbf16>, vector<1x8x16xbf16>, vector<1x8x8xf32> -> vector<1x8x8xf32>
    "tpu.trace_stop"() : () -> ()
    %cst_92 = arith.constant 2.500000e-01 : f32
    %193 = vector.broadcast %cst_92 : f32 to vector<1x8x8xf32>
    %194 = arith.mulf %192, %193 : vector<1x8x8xf32>
    %195 = vector.shape_cast %9 : vector<8x8xf32> to vector<1x8x8xf32>
    %196 = arith.addf %194, %195 : vector<1x8x8xf32>
    %cst_93 = arith.constant dense<0xFF800000> : vector<1x8xf32>
    %197 = vector.multi_reduction <maximumf>, %196, %cst_93 [2] : vector<1x8x8xf32> to vector<1x8xf32>
    %198 = vector.shape_cast %197 : vector<1x8xf32> to vector<1x8x1xf32>
    %199 = vector.broadcast %198 : vector<1x8x1xf32> to vector<1x8x8xf32>
    %200 = arith.subf %196, %199 : vector<1x8x8xf32>
    %201 = math.exp %200 : vector<1x8x8xf32>
    %cst_94 = arith.constant dense<0.000000e+00> : vector<1x8xf32>
    %202 = vector.multi_reduction <add>, %201, %cst_94 [2] : vector<1x8x8xf32> to vector<1x8xf32>
    %203 = vector.shape_cast %202 : vector<1x8xf32> to vector<1x8x1xf32>
    %204 = tpu.reciprocal %203 {approx = true} : vector<1x8x1xf32> -> vector<1x8x1xf32>
    %205 = vector.broadcast %204 : vector<1x8x1xf32> to vector<1x8x8xf32>
    %206 = arith.mulf %201, %205 : vector<1x8x8xf32>
    %207 = arith.truncf %206 : vector<1x8x8xf32> to vector<1x8x8xbf16>
    %208 = vector.extract_strided_slice %189 {offsets = [0, 0, 0], sizes = [1, 8, 16], strides = [1, 1, 1]} : vector<1x8x32xbf16> to vector<1x8x16xbf16>
    "tpu.trace_start"() <{level = 10 : i32, message = "bqk,bkd->bqd"}> : () -> ()
    %cst_95 = arith.constant dense<0.000000e+00> : vector<1x8x16xf32>
    %209 = tpu.matmul %207, %208, %cst_95 {dimension_numbers = #tpu.dot_dimension_numbers<[2], [1], [1], [2], [0, 0, 0, 1, 1, 2], [0], [0]>} : vector<1x8x8xbf16>, vector<1x8x16xbf16>, vector<1x8x16xf32> -> vector<1x8x16xf32>
    "tpu.trace_stop"() : () -> ()
    %210 = vector.extract_strided_slice %185 {offsets = [0, 0, 16], sizes = [1, 8, 16], strides = [1, 1, 1]} : vector<1x8x32xbf16> to vector<1x8x16xbf16>
    %211 = vector.extract_strided_slice %187 {offsets = [0, 0, 16], sizes = [1, 8, 16], strides = [1, 1, 1]} : vector<1x8x32xbf16> to vector<1x8x16xbf16>
    "tpu.trace_start"() <{level = 10 : i32, message = "bqd,bkd->bqk"}> : () -> ()
    %cst_96 = arith.constant dense<0.000000e+00> : vector<1x8x8xf32>
    %212 = tpu.matmul %210, %211, %cst_96 {dimension_numbers = #tpu.dot_dimension_numbers<[2], [2], [1], [1], [0, 0, 0, 1, 1, 1], [0], [0]>} : vector<1x8x16xbf16>, vector<1x8x16xbf16>, vector<1x8x8xf32> -> vector<1x8x8xf32>
    "tpu.trace_stop"() : () -> ()
    %cst_97 = arith.constant 2.500000e-01 : f32
    %213 = vector.broadcast %cst_97 : f32 to vector<1x8x8xf32>
    %214 = arith.mulf %212, %213 : vector<1x8x8xf32>
    %215 = vector.shape_cast %9 : vector<8x8xf32> to vector<1x8x8xf32>
    %216 = arith.addf %214, %215 : vector<1x8x8xf32>
    %cst_98 = arith.constant dense<0xFF800000> : vector<1x8xf32>
    %217 = vector.multi_reduction <maximumf>, %216, %cst_98 [2] : vector<1x8x8xf32> to vector<1x8xf32>
    %218 = vector.shape_cast %217 : vector<1x8xf32> to vector<1x8x1xf32>
    %219 = vector.broadcast %218 : vector<1x8x1xf32> to vector<1x8x8xf32>
    %220 = arith.subf %216, %219 : vector<1x8x8xf32>
    %221 = math.exp %220 : vector<1x8x8xf32>
    %cst_99 = arith.constant dense<0.000000e+00> : vector<1x8xf32>
    %222 = vector.multi_reduction <add>, %221, %cst_99 [2] : vector<1x8x8xf32> to vector<1x8xf32>
    %223 = vector.shape_cast %222 : vector<1x8xf32> to vector<1x8x1xf32>
    %224 = tpu.reciprocal %223 {approx = true} : vector<1x8x1xf32> -> vector<1x8x1xf32>
    %225 = vector.broadcast %224 : vector<1x8x1xf32> to vector<1x8x8xf32>
    %226 = arith.mulf %221, %225 : vector<1x8x8xf32>
    %227 = arith.truncf %226 : vector<1x8x8xf32> to vector<1x8x8xbf16>
    %228 = vector.extract_strided_slice %189 {offsets = [0, 0, 16], sizes = [1, 8, 16], strides = [1, 1, 1]} : vector<1x8x32xbf16> to vector<1x8x16xbf16>
    "tpu.trace_start"() <{level = 10 : i32, message = "bqk,bkd->bqd"}> : () -> ()
    %cst_100 = arith.constant dense<0.000000e+00> : vector<1x8x16xf32>
    %229 = tpu.matmul %227, %228, %cst_100 {dimension_numbers = #tpu.dot_dimension_numbers<[2], [1], [1], [2], [0, 0, 0, 1, 1, 2], [0], [0]>} : vector<1x8x8xbf16>, vector<1x8x16xbf16>, vector<1x8x16xf32> -> vector<1x8x16xf32>
    "tpu.trace_stop"() : () -> ()
    %230 = tpu.concatenate %209, %229 in 2 : vector<1x8x16xf32>, vector<1x8x16xf32> -> vector<1x8x32xf32>
    %231 = vector.shape_cast %230 : vector<1x8x32xf32> to vector<8x32xf32>
    %232 = arith.truncf %231 : vector<8x32xf32> to vector<8x32xbf16>
    %c1_101 = arith.constant 1 : index
    %c0_102 = arith.constant 0 : index
    %c0_103 = arith.constant 0 : index
    %233 = vector.load %arg8[%c1_101, %c0_102, %c0_103] : memref<2x32x32xbf16, #tpu.memory_space<vmem>>, vector<1x32x32xbf16>
    %234 = vector.shape_cast %233 : vector<1x32x32xbf16> to vector<32x32xbf16>
    %cst_104 = arith.constant dense<0.000000e+00> : vector<8x32xf32>
    %235 = tpu.matmul %232, %234, %cst_104 {dimension_numbers = #tpu.dot_dimension_numbers<[1], [0], [0], [1], [0, 0, 1, 1], [], []>} : vector<8x32xbf16>, vector<32x32xbf16>, vector<8x32xf32> -> vector<8x32xf32>
    %236 = arith.addf %172, %235 : vector<8x32xf32>
    %c1_105 = arith.constant 1 : index
    %c0_106 = arith.constant 0 : index
    %c0_107 = arith.constant 0 : index
    %237 = vector.load %arg9[%c1_105, %c0_106, %c0_107] : memref<2x1x32xf32, #tpu.memory_space<vmem>>, vector<1x1x32xf32>
    %238 = vector.shape_cast %237 : vector<1x1x32xf32> to vector<1x32xf32>
    %c1_108 = arith.constant 1 : index
    %c0_109 = arith.constant 0 : index
    %c0_110 = arith.constant 0 : index
    %239 = vector.load %arg10[%c1_108, %c0_109, %c0_110] : memref<2x1x32xf32, #tpu.memory_space<vmem>>, vector<1x1x32xf32>
    %240 = vector.shape_cast %239 : vector<1x1x32xf32> to vector<1x32xf32>
    %cst_111 = arith.constant dense<0.000000e+00> : vector<8xf32>
    %241 = vector.multi_reduction <add>, %236, %cst_111 [1] : vector<8x32xf32> to vector<8xf32>
    %242 = vector.shape_cast %241 : vector<8xf32> to vector<8x1xf32>
    %cst_112 = arith.constant 3.200000e+01 : f32
    %243 = vector.broadcast %cst_112 : f32 to vector<8x1xf32>
    %244 = arith.divf %242, %243 : vector<8x1xf32>
    %245 = vector.broadcast %244 : vector<8x1xf32> to vector<8x32xf32>
    %246 = arith.subf %236, %245 : vector<8x32xf32>
    %247 = arith.mulf %246, %246 : vector<8x32xf32>
    %cst_113 = arith.constant dense<0.000000e+00> : vector<8xf32>
    %248 = vector.multi_reduction <add>, %247, %cst_113 [1] : vector<8x32xf32> to vector<8xf32>
    %249 = vector.shape_cast %248 : vector<8xf32> to vector<8x1xf32>
    %cst_114 = arith.constant 3.200000e+01 : f32
    %250 = vector.broadcast %cst_114 : f32 to vector<8x1xf32>
    %251 = arith.divf %249, %250 : vector<8x1xf32>
    %252 = vector.broadcast %244 : vector<8x1xf32> to vector<8x32xf32>
    %253 = arith.subf %236, %252 : vector<8x32xf32>
    %cst_115 = arith.constant 9.99999993E-9 : f32
    %254 = vector.broadcast %cst_115 : f32 to vector<8x1xf32>
    %255 = arith.addf %251, %254 : vector<8x1xf32>
    %256 = math.rsqrt %255 : vector<8x1xf32>
    %257 = vector.broadcast %256 : vector<8x1xf32> to vector<8x32xf32>
    %258 = arith.mulf %253, %257 : vector<8x32xf32>
    %259 = vector.broadcast %238 : vector<1x32xf32> to vector<8x32xf32>
    %260 = arith.mulf %258, %259 : vector<8x32xf32>
    %261 = vector.broadcast %240 : vector<1x32xf32> to vector<8x32xf32>
    %262 = arith.addf %260, %261 : vector<8x32xf32>
    %263 = arith.truncf %262 : vector<8x32xf32> to vector<8x32xbf16>
    %c1_116 = arith.constant 1 : index
    %c0_117 = arith.constant 0 : index
    %c0_118 = arith.constant 0 : index
    %264 = vector.load %arg11[%c1_116, %c0_117, %c0_118] : memref<2x32x32xbf16, #tpu.memory_space<vmem>>, vector<1x32x32xbf16>
    %265 = vector.shape_cast %264 : vector<1x32x32xbf16> to vector<32x32xbf16>
    %cst_119 = arith.constant dense<0.000000e+00> : vector<8x32xf32>
    %266 = tpu.matmul %263, %265, %cst_119 {dimension_numbers = #tpu.dot_dimension_numbers<[1], [0], [0], [1], [0, 0, 1, 1], [], []>} : vector<8x32xbf16>, vector<32x32xbf16>, vector<8x32xf32> -> vector<8x32xf32>
    %c1_120 = arith.constant 1 : index
    %c0_121 = arith.constant 0 : index
    %c0_122 = arith.constant 0 : index
    %267 = vector.load %arg12[%c1_120, %c0_121, %c0_122] : memref<2x1x32xf32, #tpu.memory_space<vmem>>, vector<1x1x32xf32>
    %268 = vector.shape_cast %267 : vector<1x1x32xf32> to vector<1x32xf32>
    %269 = vector.broadcast %268 : vector<1x32xf32> to vector<8x32xf32>
    %270 = arith.addf %266, %269 : vector<8x32xf32>
    %cst_123 = arith.constant 0.000000e+00 : f32
    %271 = vector.broadcast %cst_123 : f32 to vector<8x32xf32>
    %272 = arith.maximumf %270, %271 : vector<8x32xf32>
    %273 = arith.truncf %272 : vector<8x32xf32> to vector<8x32xbf16>
    %c1_124 = arith.constant 1 : index
    %c0_125 = arith.constant 0 : index
    %c0_126 = arith.constant 0 : index
    %274 = vector.load %arg13[%c1_124, %c0_125, %c0_126] : memref<2x32x32xbf16, #tpu.memory_space<vmem>>, vector<1x32x32xbf16>
    %275 = vector.shape_cast %274 : vector<1x32x32xbf16> to vector<32x32xbf16>
    %cst_127 = arith.constant dense<0.000000e+00> : vector<8x32xf32>
    %276 = tpu.matmul %273, %275, %cst_127 {dimension_numbers = #tpu.dot_dimension_numbers<[1], [0], [0], [1], [0, 0, 1, 1], [], []>} : vector<8x32xbf16>, vector<32x32xbf16>, vector<8x32xf32> -> vector<8x32xf32>
    %c1_128 = arith.constant 1 : index
    %c0_129 = arith.constant 0 : index
    %c0_130 = arith.constant 0 : index
    %277 = vector.load %arg14[%c1_128, %c0_129, %c0_130] : memref<2x1x32xf32, #tpu.memory_space<vmem>>, vector<1x1x32xf32>
    %278 = vector.shape_cast %277 : vector<1x1x32xf32> to vector<1x32xf32>
    %279 = vector.broadcast %278 : vector<1x32xf32> to vector<8x32xf32>
    %280 = arith.addf %276, %279 : vector<8x32xf32>
    %281 = arith.addf %280, %262 : vector<8x32xf32>
    %282 = vector.broadcast %3 : vector<8x1xf32> to vector<8x32xf32>
    %283 = arith.mulf %281, %282 : vector<8x32xf32>
    %c0_131 = arith.constant 0 : index
    %c0_132 = arith.constant 0 : index
    %284 = vector.load %arg15[%c0_131, %c0_132] : memref<1x32xf32, #tpu.memory_space<vmem>>, vector<1x32xf32>
    %c0_133 = arith.constant 0 : index
    %c0_134 = arith.constant 0 : index
    %285 = vector.load %arg16[%c0_133, %c0_134] : memref<1x32xf32, #tpu.memory_space<vmem>>, vector<1x32xf32>
    %cst_135 = arith.constant dense<0.000000e+00> : vector<8xf32>
    %286 = vector.multi_reduction <add>, %283, %cst_135 [1] : vector<8x32xf32> to vector<8xf32>
    %287 = vector.shape_cast %286 : vector<8xf32> to vector<8x1xf32>
    %cst_136 = arith.constant 3.200000e+01 : f32
    %288 = vector.broadcast %cst_136 : f32 to vector<8x1xf32>
    %289 = arith.divf %287, %288 : vector<8x1xf32>
    %290 = vector.broadcast %289 : vector<8x1xf32> to vector<8x32xf32>
    %291 = arith.subf %283, %290 : vector<8x32xf32>
    %292 = arith.mulf %291, %291 : vector<8x32xf32>
    %cst_137 = arith.constant dense<0.000000e+00> : vector<8xf32>
    %293 = vector.multi_reduction <add>, %292, %cst_137 [1] : vector<8x32xf32> to vector<8xf32>
    %294 = vector.shape_cast %293 : vector<8xf32> to vector<8x1xf32>
    %cst_138 = arith.constant 3.200000e+01 : f32
    %295 = vector.broadcast %cst_138 : f32 to vector<8x1xf32>
    %296 = arith.divf %294, %295 : vector<8x1xf32>
    %297 = vector.broadcast %289 : vector<8x1xf32> to vector<8x32xf32>
    %298 = arith.subf %283, %297 : vector<8x32xf32>
    %cst_139 = arith.constant 9.99999993E-9 : f32
    %299 = vector.broadcast %cst_139 : f32 to vector<8x1xf32>
    %300 = arith.addf %296, %299 : vector<8x1xf32>
    %301 = math.rsqrt %300 : vector<8x1xf32>
    %302 = vector.broadcast %301 : vector<8x1xf32> to vector<8x32xf32>
    %303 = arith.mulf %298, %302 : vector<8x32xf32>
    %304 = vector.broadcast %284 : vector<1x32xf32> to vector<8x32xf32>
    %305 = arith.mulf %303, %304 : vector<8x32xf32>
    %306 = vector.broadcast %285 : vector<1x32xf32> to vector<8x32xf32>
    %307 = arith.addf %305, %306 : vector<8x32xf32>
    %c0_140 = arith.constant 0 : index
    %c0_141 = arith.constant 0 : index
    %c0_142 = arith.constant 0 : index
    %c0_143 = arith.constant 0 : index
    %308 = vector.load %arg18[%c0_140, %c0_141, %c0_142, %c0_143] : memref<3x1x8x32xbf16, #tpu.memory_space<vmem>>, vector<1x1x8x32xbf16>
    %309 = vector.shape_cast %308 : vector<1x1x8x32xbf16> to vector<8x32xbf16>
    %310 = arith.extf %309 : vector<8x32xbf16> to vector<8x32xf32>
    %c1_144 = arith.constant 1 : index
    %c0_145 = arith.constant 0 : index
    %c0_146 = arith.constant 0 : index
    %c0_147 = arith.constant 0 : index
    %311 = vector.load %arg18[%c1_144, %c0_145, %c0_146, %c0_147] : memref<3x1x8x32xbf16, #tpu.memory_space<vmem>>, vector<1x1x8x32xbf16>
    %312 = vector.shape_cast %311 : vector<1x1x8x32xbf16> to vector<8x32xbf16>
    %313 = arith.extf %312 : vector<8x32xbf16> to vector<8x32xf32>
    %c2 = arith.constant 2 : index
    %c0_148 = arith.constant 0 : index
    %c0_149 = arith.constant 0 : index
    %c0_150 = arith.constant 0 : index
    %314 = vector.load %arg18[%c2, %c0_148, %c0_149, %c0_150] : memref<3x1x8x32xbf16, #tpu.memory_space<vmem>>, vector<1x1x8x32xbf16>
    %315 = vector.shape_cast %314 : vector<1x1x8x32xbf16> to vector<8x32xbf16>
    %316 = arith.extf %315 : vector<8x32xbf16> to vector<8x32xf32>
    %cst_151 = arith.constant 0.000000e+00 : f32
    %317 = vector.broadcast %cst_151 : f32 to vector<8x1xf32>
    %cst_152 = arith.constant 0.000000e+00 : f32
    %318 = vector.broadcast %cst_152 : f32 to vector<8x1xf32>
    %cst_153 = arith.constant 0xFF800000 : f32
    %319 = vector.broadcast %cst_153 : f32 to vector<8x1xf32>
    %c0_154 = arith.constant 0 : index
    %c0_155 = arith.constant 0 : index
    %320 = vector.load %arg17[%c0_154, %c0_155] : memref<4x32xf32, #tpu.memory_space<vmem>>, vector<1x32xf32>
    %321 = vector.broadcast %320 : vector<1x32xf32> to vector<8x32xf32>
    %322 = arith.mulf %307, %321 : vector<8x32xf32>
    %323 = arith.negf %322 : vector<8x32xf32>
    %324 = math.exp %323 : vector<8x32xf32>
    %cst_156 = arith.constant 1.000000e+00 : f32
    %325 = vector.broadcast %cst_156 : f32 to vector<8x32xf32>
    %326 = arith.addf %325, %324 : vector<8x32xf32>
    %327 = arith.divf %325, %326 : vector<8x32xf32>
    %328 = arith.mulf %327, %307 : vector<8x32xf32>
    %329 = arith.addf %307, %328 : vector<8x32xf32>
    %330 = arith.mulf %329, %310 : vector<8x32xf32>
    %cst_157 = arith.constant dense<0.000000e+00> : vector<8xf32>
    %331 = vector.multi_reduction <add>, %330, %cst_157 [1] : vector<8x32xf32> to vector<8xf32>
    %332 = vector.shape_cast %331 : vector<8xf32> to vector<8x1xf32>
    %333 = arith.mulf %329, %313 : vector<8x32xf32>
    %cst_158 = arith.constant dense<0.000000e+00> : vector<8xf32>
    %334 = vector.multi_reduction <add>, %333, %cst_158 [1] : vector<8x32xf32> to vector<8xf32>
    %335 = vector.shape_cast %334 : vector<8xf32> to vector<8x1xf32>
    %336 = arith.mulf %329, %316 : vector<8x32xf32>
    %cst_159 = arith.constant dense<0.000000e+00> : vector<8xf32>
    %337 = vector.multi_reduction <add>, %336, %cst_159 [1] : vector<8x32xf32> to vector<8xf32>
    %338 = vector.shape_cast %337 : vector<8xf32> to vector<8x1xf32>
    %339 = arith.addf %317, %332 : vector<8x1xf32>
    %340 = arith.addf %318, %335 : vector<8x1xf32>
    %341 = arith.subf %332, %338 : vector<8x1xf32>
    %342 = arith.maximumf %319, %341 : vector<8x1xf32>
    %c1_160 = arith.constant 1 : index
    %c0_161 = arith.constant 0 : index
    %343 = vector.load %arg17[%c1_160, %c0_161] : memref<4x32xf32, #tpu.memory_space<vmem>>, vector<1x32xf32>
    %344 = vector.broadcast %343 : vector<1x32xf32> to vector<8x32xf32>
    %345 = arith.mulf %307, %344 : vector<8x32xf32>
    %346 = arith.negf %345 : vector<8x32xf32>
    %347 = math.exp %346 : vector<8x32xf32>
    %cst_162 = arith.constant 1.000000e+00 : f32
    %348 = vector.broadcast %cst_162 : f32 to vector<8x32xf32>
    %349 = arith.addf %348, %347 : vector<8x32xf32>
    %350 = arith.divf %348, %349 : vector<8x32xf32>
    %351 = arith.mulf %350, %307 : vector<8x32xf32>
    %352 = arith.addf %307, %351 : vector<8x32xf32>
    %353 = arith.mulf %352, %310 : vector<8x32xf32>
    %cst_163 = arith.constant dense<0.000000e+00> : vector<8xf32>
    %354 = vector.multi_reduction <add>, %353, %cst_163 [1] : vector<8x32xf32> to vector<8xf32>
    %355 = vector.shape_cast %354 : vector<8xf32> to vector<8x1xf32>
    %356 = arith.mulf %352, %313 : vector<8x32xf32>
    %cst_164 = arith.constant dense<0.000000e+00> : vector<8xf32>
    %357 = vector.multi_reduction <add>, %356, %cst_164 [1] : vector<8x32xf32> to vector<8xf32>
    %358 = vector.shape_cast %357 : vector<8xf32> to vector<8x1xf32>
    %359 = arith.mulf %352, %316 : vector<8x32xf32>
    %cst_165 = arith.constant dense<0.000000e+00> : vector<8xf32>
    %360 = vector.multi_reduction <add>, %359, %cst_165 [1] : vector<8x32xf32> to vector<8xf32>
    %361 = vector.shape_cast %360 : vector<8xf32> to vector<8x1xf32>
    %362 = arith.addf %339, %355 : vector<8x1xf32>
    %363 = arith.addf %340, %358 : vector<8x1xf32>
    %364 = arith.subf %355, %361 : vector<8x1xf32>
    %365 = arith.maximumf %342, %364 : vector<8x1xf32>
    %c2_166 = arith.constant 2 : index
    %c0_167 = arith.constant 0 : index
    %366 = vector.load %arg17[%c2_166, %c0_167] : memref<4x32xf32, #tpu.memory_space<vmem>>, vector<1x32xf32>
    %367 = vector.broadcast %366 : vector<1x32xf32> to vector<8x32xf32>
    %368 = arith.mulf %307, %367 : vector<8x32xf32>
    %369 = arith.negf %368 : vector<8x32xf32>
    %370 = math.exp %369 : vector<8x32xf32>
    %cst_168 = arith.constant 1.000000e+00 : f32
    %371 = vector.broadcast %cst_168 : f32 to vector<8x32xf32>
    %372 = arith.addf %371, %370 : vector<8x32xf32>
    %373 = arith.divf %371, %372 : vector<8x32xf32>
    %374 = arith.mulf %373, %307 : vector<8x32xf32>
    %375 = arith.addf %307, %374 : vector<8x32xf32>
    %376 = arith.mulf %375, %310 : vector<8x32xf32>
    %cst_169 = arith.constant dense<0.000000e+00> : vector<8xf32>
    %377 = vector.multi_reduction <add>, %376, %cst_169 [1] : vector<8x32xf32> to vector<8xf32>
    %378 = vector.shape_cast %377 : vector<8xf32> to vector<8x1xf32>
    %379 = arith.mulf %375, %313 : vector<8x32xf32>
    %cst_170 = arith.constant dense<0.000000e+00> : vector<8xf32>
    %380 = vector.multi_reduction <add>, %379, %cst_170 [1] : vector<8x32xf32> to vector<8xf32>
    %381 = vector.shape_cast %380 : vector<8xf32> to vector<8x1xf32>
    %382 = arith.mulf %375, %316 : vector<8x32xf32>
    %cst_171 = arith.constant dense<0.000000e+00> : vector<8xf32>
    %383 = vector.multi_reduction <add>, %382, %cst_171 [1] : vector<8x32xf32> to vector<8xf32>
    %384 = vector.shape_cast %383 : vector<8xf32> to vector<8x1xf32>
    %385 = arith.addf %362, %378 : vector<8x1xf32>
    %386 = arith.addf %363, %381 : vector<8x1xf32>
    %387 = arith.subf %378, %384 : vector<8x1xf32>
    %388 = arith.maximumf %365, %387 : vector<8x1xf32>
    %c3 = arith.constant 3 : index
    %c0_172 = arith.constant 0 : index
    %389 = vector.load %arg17[%c3, %c0_172] : memref<4x32xf32, #tpu.memory_space<vmem>>, vector<1x32xf32>
    %390 = vector.broadcast %389 : vector<1x32xf32> to vector<8x32xf32>
    %391 = arith.mulf %307, %390 : vector<8x32xf32>
    %392 = arith.negf %391 : vector<8x32xf32>
    %393 = math.exp %392 : vector<8x32xf32>
    %cst_173 = arith.constant 1.000000e+00 : f32
    %394 = vector.broadcast %cst_173 : f32 to vector<8x32xf32>
    %395 = arith.addf %394, %393 : vector<8x32xf32>
    %396 = arith.divf %394, %395 : vector<8x32xf32>
    %397 = arith.mulf %396, %307 : vector<8x32xf32>
    %398 = arith.addf %307, %397 : vector<8x32xf32>
    %399 = arith.mulf %398, %310 : vector<8x32xf32>
    %cst_174 = arith.constant dense<0.000000e+00> : vector<8xf32>
    %400 = vector.multi_reduction <add>, %399, %cst_174 [1] : vector<8x32xf32> to vector<8xf32>
    %401 = vector.shape_cast %400 : vector<8xf32> to vector<8x1xf32>
    %402 = arith.mulf %398, %313 : vector<8x32xf32>
    %cst_175 = arith.constant dense<0.000000e+00> : vector<8xf32>
    %403 = vector.multi_reduction <add>, %402, %cst_175 [1] : vector<8x32xf32> to vector<8xf32>
    %404 = vector.shape_cast %403 : vector<8xf32> to vector<8x1xf32>
    %405 = arith.mulf %398, %316 : vector<8x32xf32>
    %cst_176 = arith.constant dense<0.000000e+00> : vector<8xf32>
    %406 = vector.multi_reduction <add>, %405, %cst_176 [1] : vector<8x32xf32> to vector<8xf32>
    %407 = vector.shape_cast %406 : vector<8xf32> to vector<8x1xf32>
    %408 = arith.addf %385, %401 : vector<8x1xf32>
    %409 = arith.addf %386, %404 : vector<8x1xf32>
    %410 = arith.subf %401, %407 : vector<8x1xf32>
    %411 = arith.maximumf %388, %410 : vector<8x1xf32>
    %412 = tpu.concatenate %408, %409, %411 in 1 : vector<8x1xf32>, vector<8x1xf32>, vector<8x1xf32> -> vector<8x3xf32>
    %c0_177 = arith.constant 0 : index
    %c0_178 = arith.constant 0 : index
    %c0_179 = arith.constant 0 : index
    %413 = vector.load %arg19[%c0_177, %c0_178, %c0_179] : memref<1x8x3xf32, #tpu.memory_space<vmem>>, vector<1x8x3xf32>
    %414 = vector.shape_cast %413 : vector<1x8x3xf32> to vector<8x3xf32>
    %415 = vector.shape_cast %412 : vector<8x3xf32> to vector<1x8x3xf32>
    tpu.vector_store %arg19[%c0_177, %c0_178, %c0_179], %415 {strides = array<i32>} : memref<1x8x3xf32, #tpu.memory_space<vmem>>, vector<1x8x3xf32>,
    return
  }
  func.func @transform_0(%arg0: i32) -> (i32, i32, i32) {
    %c0_i32 = arith.constant 0 : i32
    %c0_i32_0 = arith.constant 0 : i32
    %c0_i32_1 = arith.constant 0 : i32
    return %arg0, %c0_i32, %c0_i32_0 : i32, i32, i32
  }
  func.func @transform_1(%arg0: i32) -> (i32, i32, i32) {
    %c0_i32 = arith.constant 0 : i32
    %c0_i32_0 = arith.constant 0 : i32
    %c0_i32_1 = arith.constant 0 : i32
    return %arg0, %c0_i32, %c0_i32_0 : i32, i32, i32
  }
  func.func @transform_2(%arg0: i32) -> (i32, i32, i32) {
    %c0_i32 = arith.constant 0 : i32
    %c0_i32_0 = arith.constant 0 : i32
    %c0_i32_1 = arith.constant 0 : i32
    %c0_i32_2 = arith.constant 0 : i32
    return %c0_i32, %c0_i32_0, %c0_i32_1 : i32, i32, i32
  }
  func.func @transform_3(%arg0: i32) -> (i32, i32, i32) {
    %c0_i32 = arith.constant 0 : i32
    %c0_i32_0 = arith.constant 0 : i32
    %c0_i32_1 = arith.constant 0 : i32
    %c0_i32_2 = arith.constant 0 : i32
    return %c0_i32, %c0_i32_0, %c0_i32_1 : i32, i32, i32
  }
  func.func @transform_4(%arg0: i32) -> (i32, i32, i32) {
    %c0_i32 = arith.constant 0 : i32
    %c0_i32_0 = arith.constant 0 : i32
    %c0_i32_1 = arith.constant 0 : i32
    %c0_i32_2 = arith.constant 0 : i32
    return %c0_i32, %c0_i32_0, %c0_i32_1 : i32, i32, i32
  }
  func.func @transform_5(%arg0: i32) -> (i32, i32, i32) {
    %c0_i32 = arith.constant 0 : i32
    %c0_i32_0 = arith.constant 0 : i32
    %c0_i32_1 = arith.constant 0 : i32
    %c0_i32_2 = arith.constant 0 : i32
    return %c0_i32, %c0_i32_0, %c0_i32_1 : i32, i32, i32
  }
  func.func @transform_6(%arg0: i32) -> (i32, i32, i32) {
    %c0_i32 = arith.constant 0 : i32
    %c0_i32_0 = arith.constant 0 : i32
    %c0_i32_1 = arith.constant 0 : i32
    %c0_i32_2 = arith.constant 0 : i32
    return %c0_i32, %c0_i32_0, %c0_i32_1 : i32, i32, i32
  }
  func.func @transform_7(%arg0: i32) -> (i32, i32, i32) {
    %c0_i32 = arith.constant 0 : i32
    %c0_i32_0 = arith.constant 0 : i32
    %c0_i32_1 = arith.constant 0 : i32
    %c0_i32_2 = arith.constant 0 : i32
    return %c0_i32, %c0_i32_0, %c0_i32_1 : i32, i32, i32
  }
  func.func @transform_8(%arg0: i32) -> (i32, i32, i32) {
    %c0_i32 = arith.constant 0 : i32
    %c0_i32_0 = arith.constant 0 : i32
    %c0_i32_1 = arith.constant 0 : i32
    %c0_i32_2 = arith.constant 0 : i32
    return %c0_i32, %c0_i32_0, %c0_i32_1 : i32, i32, i32
  }
  func.func @transform_9(%arg0: i32) -> (i32, i32, i32) {
    %c0_i32 = arith.constant 0 : i32
    %c0_i32_0 = arith.constant 0 : i32
    %c0_i32_1 = arith.constant 0 : i32
    %c0_i32_2 = arith.constant 0 : i32
    return %c0_i32, %c0_i32_0, %c0_i32_1 : i32, i32, i32
  }
  func.func @transform_10(%arg0: i32) -> (i32, i32, i32) {
    %c0_i32 = arith.constant 0 : i32
    %c0_i32_0 = arith.constant 0 : i32
    %c0_i32_1 = arith.constant 0 : i32
    %c0_i32_2 = arith.constant 0 : i32
    return %c0_i32, %c0_i32_0, %c0_i32_1 : i32, i32, i32
  }
  func.func @transform_11(%arg0: i32) -> (i32, i32, i32) {
    %c0_i32 = arith.constant 0 : i32
    %c0_i32_0 = arith.constant 0 : i32
    %c0_i32_1 = arith.constant 0 : i32
    %c0_i32_2 = arith.constant 0 : i32
    return %c0_i32, %c0_i32_0, %c0_i32_1 : i32, i32, i32
  }
  func.func @transform_12(%arg0: i32) -> (i32, i32, i32) {
    %c0_i32 = arith.constant 0 : i32
    %c0_i32_0 = arith.constant 0 : i32
    %c0_i32_1 = arith.constant 0 : i32
    %c0_i32_2 = arith.constant 0 : i32
    return %c0_i32, %c0_i32_0, %c0_i32_1 : i32, i32, i32
  }
  func.func @transform_13(%arg0: i32) -> (i32, i32, i32) {
    %c0_i32 = arith.constant 0 : i32
    %c0_i32_0 = arith.constant 0 : i32
    %c0_i32_1 = arith.constant 0 : i32
    %c0_i32_2 = arith.constant 0 : i32
    return %c0_i32, %c0_i32_0, %c0_i32_1 : i32, i32, i32
  }
  func.func @transform_14(%arg0: i32) -> (i32, i32) {
    %c0_i32 = arith.constant 0 : i32
    %c0_i32_0 = arith.constant 0 : i32
    %c0_i32_1 = arith.constant 0 : i32
    return %c0_i32, %c0_i32_0 : i32, i32
  }
  func.func @transform_15(%arg0: i32) -> (i32, i32) {
    %c0_i32 = arith.constant 0 : i32
    %c0_i32_0 = arith.constant 0 : i32
    %c0_i32_1 = arith.constant 0 : i32
    return %c0_i32, %c0_i32_0 : i32, i32
  }
  func.func @transform_16(%arg0: i32) -> (i32, i32) {
    %c0_i32 = arith.constant 0 : i32
    %c0_i32_0 = arith.constant 0 : i32
    %c0_i32_1 = arith.constant 0 : i32
    return %c0_i32, %c0_i32_0 : i32, i32
  }
  func.func @transform_17(%arg0: i32) -> (i32, i32, i32, i32) {
    %c0_i32 = arith.constant 0 : i32
    %c0_i32_0 = arith.constant 0 : i32
    %c0_i32_1 = arith.constant 0 : i32
    %c0_i32_2 = arith.constant 0 : i32
    return %c0_i32, %arg0, %c0_i32_0, %c0_i32_1 : i32, i32, i32, i32
  }
  func.func @transform_18(%arg0: i32) -> (i32, i32, i32) {
    %c0_i32 = arith.constant 0 : i32
    %c0_i32_0 = arith.constant 0 : i32
    %c0_i32_1 = arith.constant 0 : i32
    return %arg0, %c0_i32, %c0_i32_0 : i32, i32, i32
  }
}

</mosaic_0001>

<llo_original>
// kernel: tpu_custom_call.1
$region0: #{tpu_custom_call.1}
  #allocation0 [shape = 'u32[]', space=smem, size = 0x4, offset = 0x4, fixed_abs, tag = 'smem constant byte address 0x4 - core index']
  #allocation1 [shape = 'u32[72,128]{1,0:T(1,128)}', space=vmem, size = 0x9000, scoped, tag = 'internal scratch']
  %s0 = inlined_call_operand.hbm [shape: f32[2,8,32], index: 0, kind: input, shape index: {}]
  %s1 = inlined_call_operand.vmem [shape: f32[2,8,1], index: 1, kind: input, shape index: {}]
  %s2 = inlined_call_operand.vmem [shape: f32[2,1,32], index: 2, kind: input, shape index: {}]
  %s3 = inlined_call_operand.vmem [shape: f32[2,1,32], index: 3, kind: input, shape index: {}]
  %s4 = inlined_call_operand.hbm [shape: bf16[2,32,32], index: 4, kind: input, shape index: {}]
  %s5 = inlined_call_operand.hbm [shape: bf16[2,32,32], index: 5, kind: input, shape index: {}]
  %s6 = inlined_call_operand.hbm [shape: bf16[2,32,32], index: 6, kind: input, shape index: {}]
  %s7 = inlined_call_operand.hbm [shape: bf16[2,32,32], index: 7, kind: input, shape index: {}]
  %s8 = inlined_call_operand.vmem [shape: f32[2,1,32], index: 8, kind: input, shape index: {}]
  %s9 = inlined_call_operand.hbm [shape: f32[2,1,32], index: 9, kind: input, shape index: {}]
  %s10 = inlined_call_operand.hbm [shape: bf16[2,32,32], index: 10, kind: input, shape index: {}]
  %s11 = inlined_call_operand.hbm [shape: f32[2,1,32], index: 11, kind: input, shape index: {}]
  %s12 = inlined_call_operand.hbm [shape: bf16[2,32,32], index: 12, kind: input, shape index: {}]
  %s13 = inlined_call_operand.hbm [shape: f32[2,1,32], index: 13, kind: input, shape index: {}]
  %s14 = inlined_call_operand.hbm [shape: f32[1,32], index: 14, kind: input, shape index: {}]
  %s15 = inlined_call_operand.hbm [shape: f32[1,32], index: 15, kind: input, shape index: {}]
  %s16 = inlined_call_operand.vmem [shape: f32[4,32], index: 16, kind: input, shape index: {}]
  %s17 = inlined_call_operand.vmem [shape: bf16[3,2,8,32], index: 17, kind: input, shape index: {}]
  %s18 = inlined_call_operand.vmem [shape: f32[2,8,3], index: 18, kind: output, shape index: {}]
  %s19 = sld [smem:[#allocation0]]
  $region194: #{tpu_custom_call.1} parent=0
    _
  %s21 = ssub.s32 1, %s19
  %s22 = scalar_select 0, %s21, %s19
  $region1: #{tpu_custom_call.1} parent=0
    #allocation2 [shape = 'u8[8192]{0}', space=vmem, size = 0x2000, scoped, tag = 'input window, operand 0']
    #allocation3 [shape = 's32[2]{0}', space=sflag, size = 0x8, scoped, tag = 'scoped memory for tpu_custom_call.1']
    #allocation4 [shape = 'u8[16384]{0}', space=vmem, size = 0x4000, scoped, tag = 'input window, operand 4, single buffered']
    #allocation5 [shape = 's32[1]{0}', space=sflag, size = 0x4, scoped, tag = 'scoped memory for tpu_custom_call.1']
    #allocation6 [shape = 'u8[16384]{0}', space=vmem, size = 0x4000, scoped, tag = 'input window, operand 5, single buffered']
    #allocation7 [shape = 'u8[16384]{0}', space=vmem, size = 0x4000, scoped, tag = 'input window, operand 6, single buffered']
    #allocation8 [shape = 's32[1]{0}', space=sflag, size = 0x4, scoped, tag = 'scoped memory for tpu_custom_call.1']
    #allocation9 [shape = 'u8[16384]{0}', space=vmem, size = 0x4000, scoped, tag = 'input window, operand 7, single buffered']
    #allocation10 [shape = 'u8[1024]{0}', space=vmem, size = 0x400, scoped, tag = 'input window, operand 9, single buffered']
    #allocation11 [shape = 's32[1]{0}', space=sflag, size = 0x4, scoped, tag = 'scoped memory for tpu_custom_call.1']
    #allocation12 [shape = 'u8[16384]{0}', space=vmem, size = 0x4000, scoped, tag = 'input window, operand 10, single buffered']
    #allocation13 [shape = 'u8[1024]{0}', space=vmem, size = 0x400, scoped, tag = 'input window, operand 11, single buffered']
    #allocation14 [shape = 's32[1]{0}', space=sflag, size = 0x4, scoped, tag = 'scoped memory for tpu_custom_call.1']
    #allocation15 [shape = 'u8[16384]{0}', space=vmem, size = 0x4000, scoped, tag = 'input window, operand 12, single buffered']
    #allocation16 [shape = 'u8[1024]{0}', space=vmem, size = 0x400, scoped, tag = 'input window, operand 13, single buffered']
    #allocation17 [shape = 's32[1]{0}', space=sflag, size = 0x4, scoped, tag = 'scoped memory for tpu_custom_call.1']
    #allocation18 [shape = 'u8[512]{0}', space=vmem, size = 0x400, scoped, tag = 'input window, operand 14, single buffered']
    #allocation19 [shape = 'u8[512]{0}', space=vmem, size = 0x400, scoped, tag = 'input window, operand 15, single buffered']
    #allocation20 [shape = 's32[1]{0}', space=sflag, size = 0x4, scoped, tag = 'scoped memory for tpu_custom_call.1']
    #allocation21 [shape = 'u8[12288]{0}', space=vmem, size = 0x3000, scoped, tag = 'input window, operand 17']
    %23 = vsyncpa [#allocation3], 0
    %s24 = scalar_lea.sflag [#allocation3], 1
    %25 = vsyncpa %s24, 0
    %26 = vsyncpa [#allocation5], 0
    %27 = vsyncpa [#allocation8], 0
    %28 = vsyncpa [#allocation11], 0
    %29 = vsyncpa [#allocation14], 0
    %30 = vsyncpa [#allocation17], 0
    %31 = vsyncpa [#allocation20], 0
    loop: start=0, step=1, limit=4
    $region2: #{tpu_custom_call.1} parent=1 // loop_pre_header
      _
    $region3: #{tpu_custom_call.1} parent=1 // loop_header
      %s33 = sphi 0, %s37
      %p34 = scmp.ge.s32.totalorder %s33, 4
      %s43 = sphi 0, %s45
      %s46 = sphi 0, %s43
      %s47 = sphi 0, %s46
      %s63 = sphi 0, %s47
      %s69 = sphi 0, %s71
      %s72 = sphi 0, %s69
      %s73 = sphi 0, %s72
      %s89 = sphi 0, %s73
      %s93 = sphi 0, %s93
      %s95 = sphi 0, %s93
      %s96 = sphi 0, %s95
      %s110 = sphi 0, %s96
      %s114 = sphi 0, %s114
      %s116 = sphi 0, %s114
      %s117 = sphi 0, %s116
      %s131 = sphi 0, %s117
      %s135 = sphi 0, %s135
      %s137 = sphi 0, %s135
      %s138 = sphi 0, %s137
      %s152 = sphi 0, %s138
      %s156 = sphi 0, %s156
      %s158 = sphi 0, %s156
      %s159 = sphi 0, %s158
      %s173 = sphi 0, %s159
      %s177 = sphi 0, %s177
      %s179 = sphi 0, %s177
      %s180 = sphi 0, %s179
      %s194 = sphi 0, %s180
      %s198 = sphi 0, %s198
      %s200 = sphi 0, %s198
      %s201 = sphi 0, %s200
      %s215 = sphi 0, %s201
      %s219 = sphi 0, %s219
      %s221 = sphi 0, %s219
      %s222 = sphi 0, %s221
      %s236 = sphi 0, %s222
      %s240 = sphi 0, %s240
      %s242 = sphi 0, %s240
      %s243 = sphi 0, %s242
      %s257 = sphi 0, %s243
      %s261 = sphi 0, %s261
      %s263 = sphi 0, %s261
      %s264 = sphi 0, %s263
      %s278 = sphi 0, %s264
      %s282 = sphi 0, %s282
      %s284 = sphi 0, %s282
      %s285 = sphi 0, %s284
      %s299 = sphi 0, %s285
      %s303 = sphi 0, %s303
      %s305 = sphi 0, %s303
      %s306 = sphi 0, %s305
      %s320 = sphi 0, %s306
      %s324 = sphi 0, %s324
      %s326 = sphi 0, %s324
      %s327 = sphi 0, %s326
      %s341 = sphi 0, %s327
      %s345 = sphi 0, %s345
      %s347 = sphi 0, %s345
      %s348 = sphi 0, %s347
      %s362 = sphi 0, %s348
      %s366 = sphi 0, %s366
      %s368 = sphi 0, %s366
      %s369 = sphi 0, %s368
      %s383 = sphi 0, %s369
      %s387 = sphi 0, %s387
      %s389 = sphi 0, %s387
      %s390 = sphi 0, %s389
      %s404 = sphi 0, %s390
      %s410 = sphi 0, %s412
      %s413 = sphi 0, %s410
      %s414 = sphi 0, %s413
      %s430 = sphi 0, %s414
      %s436 = sphi 0, %s438
      %s439 = sphi 0, %s436
      %s440 = sphi 0, %s439
      %s456 = sphi 0, %s440
    $region4: #{tpu_custom_call.1} parent=1 // loop_header_branch
      %36 = sbr.rel (%p34) target = $region8
    $region5: #{tpu_custom_call.1} parent=1 // loop_body
      %s38 = ssub.s32 %s33, 1
      %s39 = ssub.s32 %s33, 2
      %s40 = sadd.s32 %s33, 1
      %s41 = ssub.s32 %s33, %s40
      %p42 = scmp.eq.s32.totalorder %s41, 0
      %s44 = sadd.s32 %s43, 1
      %s45 = scalar_select %p42, %s43, %s44
      %p48 = pneg %p42
      %p49 = scmp.eq.s32.totalorder %s33, 1
      %p50 = por %p48, %p49
      %p51 = scmp.ne.s32.totalorder %s43, %s46
      %p52 = scmp.eq.s32.totalorder %s33, 0
      %p53 = por %p51, %p52
      %p54 = scmp.ne.s32.totalorder %s43, %s46
      %p55 = scmp.eq.s32.totalorder %s38, 1
      %p56 = por %p54, %p55
      %p57 = scmp.ne.s32.totalorder %s46, %s47
      %p58 = scmp.eq.s32.totalorder %s38, 0
      %p59 = por %p57, %p58
      %p60 = scmp.ne.s32.totalorder %s46, %s47
      %p61 = scmp.eq.s32.totalorder %s39, 1
      %p62 = por %p60, %p61
      %p64 = scmp.ne.s32.totalorder %s47, %s63
      %p65 = scmp.eq.s32.totalorder %s39, 0
      %p66 = por %p64, %p65
      %s67 = ssub.s32 %s33, %s40
      %p68 = scmp.eq.s32.totalorder %s67, 0
      %s70 = sadd.s32 %s69, 1
      %s71 = scalar_select %p68, %s69, %s70
      %p74 = pneg %p68
      %p75 = scmp.eq.s32.totalorder %s33, 1
      %p76 = por %p74, %p75
      %p77 = scmp.ne.s32.totalorder %s69, %s72
      %p78 = scmp.eq.s32.totalorder %s33, 0
      %p79 = por %p77, %p78
      %p80 = scmp.ne.s32.totalorder %s69, %s72
      %p81 = scmp.eq.s32.totalorder %s38, 1
      %p82 = por %p80, %p81
      %p83 = scmp.ne.s32.totalorder %s72, %s73
      %p84 = scmp.eq.s32.totalorder %s38, 0
      %p85 = por %p83, %p84
      %p86 = scmp.ne.s32.totalorder %s72, %s73
      %p87 = scmp.eq.s32.totalorder %s39, 1
      %p88 = por %p86, %p87
      %p90 = scmp.ne.s32.totalorder %s73, %s89
      %p91 = scmp.eq.s32.totalorder %s39, 0
      %p92 = por %p90, %p91
      %s94 = sadd.s32 %s93, 1
      %p97 = scmp.eq.s32.totalorder %s33, 1
      %p98 = scmp.ne.s32.totalorder %s93, %s95
      %p99 = scmp.eq.s32.totalorder %s33, 0
      %p100 = por %p98, %p99
      %p101 = scmp.ne.s32.totalorder %s93, %s95
      %p102 = scmp.eq.s32.totalorder %s38, 1
      %p103 = por %p101, %p102
      %p104 = scmp.ne.s32.totalorder %s95, %s96
      %p105 = scmp.eq.s32.totalorder %s38, 0
      %p106 = por %p104, %p105
      %p107 = scmp.ne.s32.totalorder %s95, %s96
      %p108 = scmp.eq.s32.totalorder %s39, 1
      %p109 = por %p107, %p108
      %p111 = scmp.ne.s32.totalorder %s96, %s110
      %p112 = scmp.eq.s32.totalorder %s39, 0
      %p113 = por %p111, %p112
      %s115 = sadd.s32 %s114, 1
      %p118 = scmp.eq.s32.totalorder %s33, 1
      %p119 = scmp.ne.s32.totalorder %s114, %s116
      %p120 = scmp.eq.s32.totalorder %s33, 0
      %p121 = por %p119, %p120
      %p122 = scmp.ne.s32.totalorder %s114, %s116
      %p123 = scmp.eq.s32.totalorder %s38, 1
      %p124 = por %p122, %p123
      %p125 = scmp.ne.s32.totalorder %s116, %s117
      %p126 = scmp.eq.s32.totalorder %s38, 0
      %p127 = por %p125, %p126
      %p128 = scmp.ne.s32.totalorder %s116, %s117
      %p129 = scmp.eq.s32.totalorder %s39, 1
      %p130 = por %p128, %p129
      %p132 = scmp.ne.s32.totalorder %s117, %s131
      %p133 = scmp.eq.s32.totalorder %s39, 0
      %p134 = por %p132, %p133
      %s136 = sadd.s32 %s135, 1
      %p139 = scmp.eq.s32.totalorder %s33, 1
      %p140 = scmp.ne.s32.totalorder %s135, %s137
      %p141 = scmp.eq.s32.totalorder %s33, 0
      %p142 = por %p140, %p141
      %p143 = scmp.ne.s32.totalorder %s135, %s137
      %p144 = scmp.eq.s32.totalorder %s38, 1
      %p145 = por %p143, %p144
      %p146 = scmp.ne.s32.totalorder %s137, %s138
      %p147 = scmp.eq.s32.totalorder %s38, 0
      %p148 = por %p146, %p147
      %p149 = scmp.ne.s32.totalorder %s137, %s138
      %p150 = scmp.eq.s32.totalorder %s39, 1
      %p151 = por %p149, %p150
      %p153 = scmp.ne.s32.totalorder %s138, %s152
      %p154 = scmp.eq.s32.totalorder %s39, 0
      %p155 = por %p153, %p154
      %s157 = sadd.s32 %s156, 1
      %p160 = scmp.eq.s32.totalorder %s33, 1
      %p161 = scmp.ne.s32.totalorder %s156, %s158
      %p162 = scmp.eq.s32.totalorder %s33, 0
      %p163 = por %p161, %p162
      %p164 = scmp.ne.s32.totalorder %s156, %s158
      %p165 = scmp.eq.s32.totalorder %s38, 1
      %p166 = por %p164, %p165
      %p167 = scmp.ne.s32.totalorder %s158, %s159
      %p168 = scmp.eq.s32.totalorder %s38, 0
      %p169 = por %p167, %p168
      %p170 = scmp.ne.s32.totalorder %s158, %s159
      %p171 = scmp.eq.s32.totalorder %s39, 1
      %p172 = por %p170, %p171
      %p174 = scmp.ne.s32.totalorder %s159, %s173
      %p175 = scmp.eq.s32.totalorder %s39, 0
      %p176 = por %p174, %p175
      %s178 = sadd.s32 %s177, 1
      %p181 = scmp.eq.s32.totalorder %s33, 1
      %p182 = scmp.ne.s32.totalorder %s177, %s179
      %p183 = scmp.eq.s32.totalorder %s33, 0
      %p184 = por %p182, %p183
      %p185 = scmp.ne.s32.totalorder %s177, %s179
      %p186 = scmp.eq.s32.totalorder %s38, 1
      %p187 = por %p185, %p186
      %p188 = scmp.ne.s32.totalorder %s179, %s180
      %p189 = scmp.eq.s32.totalorder %s38, 0
      %p190 = por %p188, %p189
      %p191 = scmp.ne.s32.totalorder %s179, %s180
      %p192 = scmp.eq.s32.totalorder %s39, 1
      %p193 = por %p191, %p192
      %p195 = scmp.ne.s32.totalorder %s180, %s194
      %p196 = scmp.eq.s32.totalorder %s39, 0
      %p197 = por %p195, %p196
      %s199 = sadd.s32 %s198, 1
      %p202 = scmp.eq.s32.totalorder %s33, 1
      %p203 = scmp.ne.s32.totalorder %s198, %s200
      %p204 = scmp.eq.s32.totalorder %s33, 0
      %p205 = por %p203, %p204
      %p206 = scmp.ne.s32.totalorder %s198, %s200
      %p207 = scmp.eq.s32.totalorder %s38, 1
      %p208 = por %p206, %p207
      %p209 = scmp.ne.s32.totalorder %s200, %s201
      %p210 = scmp.eq.s32.totalorder %s38, 0
      %p211 = por %p209, %p210
      %p212 = scmp.ne.s32.totalorder %s200, %s201
      %p213 = scmp.eq.s32.totalorder %s39, 1
      %p214 = por %p212, %p213
      %p216 = scmp.ne.s32.totalorder %s201, %s215
      %p217 = scmp.eq.s32.totalorder %s39, 0
      %p218 = por %p216, %p217
      %s220 = sadd.s32 %s219, 1
      %p223 = scmp.eq.s32.totalorder %s33, 1
      %p224 = scmp.ne.s32.totalorder %s219, %s221
      %p225 = scmp.eq.s32.totalorder %s33, 0
      %p226 = por %p224, %p225
      %p227 = scmp.ne.s32.totalorder %s219, %s221
      %p228 = scmp.eq.s32.totalorder %s38, 1
      %p229 = por %p227, %p228
      %p230 = scmp.ne.s32.totalorder %s221, %s222
      %p231 = scmp.eq.s32.totalorder %s38, 0
      %p232 = por %p230, %p231
      %p233 = scmp.ne.s32.totalorder %s221, %s222
      %p234 = scmp.eq.s32.totalorder %s39, 1
      %p235 = por %p233, %p234
      %p237 = scmp.ne.s32.totalorder %s222, %s236
      %p238 = scmp.eq.s32.totalorder %s39, 0
      %p239 = por %p237, %p238
      %s241 = sadd.s32 %s240, 1
      %p244 = scmp.eq.s32.totalorder %s33, 1
      %p245 = scmp.ne.s32.totalorder %s240, %s242
      %p246 = scmp.eq.s32.totalorder %s33, 0
      %p247 = por %p245, %p246
      %p248 = scmp.ne.s32.totalorder %s240, %s242
      %p249 = scmp.eq.s32.totalorder %s38, 1
      %p250 = por %p248, %p249
      %p251 = scmp.ne.s32.totalorder %s242, %s243
      %p252 = scmp.eq.s32.totalorder %s38, 0
      %p253 = por %p251, %p252
      %p254 = scmp.ne.s32.totalorder %s242, %s243
      %p255 = scmp.eq.s32.totalorder %s39, 1
      %p256 = por %p254, %p255
      %p258 = scmp.ne.s32.totalorder %s243, %s257
      %p259 = scmp.eq.s32.totalorder %s39, 0
      %p260 = por %p258, %p259
      %s262 = sadd.s32 %s261, 1
      %p265 = scmp.eq.s32.totalorder %s33, 1
      %p266 = scmp.ne.s32.totalorder %s261, %s263
      %p267 = scmp.eq.s32.totalorder %s33, 0
      %p268 = por %p266, %p267
      %p269 = scmp.ne.s32.totalorder %s261, %s263
      %p270 = scmp.eq.s32.totalorder %s38, 1
      %p271 = por %p269, %p270
      %p272 = scmp.ne.s32.totalorder %s263, %s264
      %p273 = scmp.eq.s32.totalorder %s38, 0
      %p274 = por %p272, %p273
      %p275 = scmp.ne.s32.totalorder %s263, %s264
      %p276 = scmp.eq.s32.totalorder %s39, 1
      %p277 = por %p275, %p276
      %p279 = scmp.ne.s32.totalorder %s264, %s278
      %p280 = scmp.eq.s32.totalorder %s39, 0
      %p281 = por %p279, %p280
      %s283 = sadd.s32 %s282, 1
      %p286 = scmp.eq.s32.totalorder %s33, 1
      %p287 = scmp.ne.s32.totalorder %s282, %s284
      %p288 = scmp.eq.s32.totalorder %s33, 0
      %p289 = por %p287, %p288
      %p290 = scmp.ne.s32.totalorder %s282, %s284
      %p291 = scmp.eq.s32.totalorder %s38, 1
      %p292 = por %p290, %p291
      %p293 = scmp.ne.s32.totalorder %s284, %s285
      %p294 = scmp.eq.s32.totalorder %s38, 0
      %p295 = por %p293, %p294
      %p296 = scmp.ne.s32.totalorder %s284, %s285
      %p297 = scmp.eq.s32.totalorder %s39, 1
      %p298 = por %p296, %p297
      %p300 = scmp.ne.s32.totalorder %s285, %s299
      %p301 = scmp.eq.s32.totalorder %s39, 0
      %p302 = por %p300, %p301
      %s304 = sadd.s32 %s303, 1
      %p307 = scmp.eq.s32.totalorder %s33, 1
      %p308 = scmp.ne.s32.totalorder %s303, %s305
      %p309 = scmp.eq.s32.totalorder %s33, 0
      %p310 = por %p308, %p309
      %p311 = scmp.ne.s32.totalorder %s303, %s305
      %p312 = scmp.eq.s32.totalorder %s38, 1
      %p313 = por %p311, %p312
      %p314 = scmp.ne.s32.totalorder %s305, %s306
      %p315 = scmp.eq.s32.totalorder %s38, 0
      %p316 = por %p314, %p315
      %p317 = scmp.ne.s32.totalorder %s305, %s306
      %p318 = scmp.eq.s32.totalorder %s39, 1
      %p319 = por %p317, %p318
      %p321 = scmp.ne.s32.totalorder %s306, %s320
      %p322 = scmp.eq.s32.totalorder %s39, 0
      %p323 = por %p321, %p322
      %s325 = sadd.s32 %s324, 1
      %p328 = scmp.eq.s32.totalorder %s33, 1
      %p329 = scmp.ne.s32.totalorder %s324, %s326
      %p330 = scmp.eq.s32.totalorder %s33, 0
      %p331 = por %p329, %p330
      %p332 = scmp.ne.s32.totalorder %s324, %s326
      %p333 = scmp.eq.s32.totalorder %s38, 1
      %p334 = por %p332, %p333
      %p335 = scmp.ne.s32.totalorder %s326, %s327
      %p336 = scmp.eq.s32.totalorder %s38, 0
      %p337 = por %p335, %p336
      %p338 = scmp.ne.s32.totalorder %s326, %s327
      %p339 = scmp.eq.s32.totalorder %s39, 1
      %p340 = por %p338, %p339
      %p342 = scmp.ne.s32.totalorder %s327, %s341
      %p343 = scmp.eq.s32.totalorder %s39, 0
      %p344 = por %p342, %p343
      %s346 = sadd.s32 %s345, 1
      %p349 = scmp.eq.s32.totalorder %s33, 1
      %p350 = scmp.ne.s32.totalorder %s345, %s347
      %p351 = scmp.eq.s32.totalorder %s33, 0
      %p352 = por %p350, %p351
      %p353 = scmp.ne.s32.totalorder %s345, %s347
      %p354 = scmp.eq.s32.totalorder %s38, 1
      %p355 = por %p353, %p354
      %p356 = scmp.ne.s32.totalorder %s347, %s348
      %p357 = scmp.eq.s32.totalorder %s38, 0
      %p358 = por %p356, %p357
      %p359 = scmp.ne.s32.totalorder %s347, %s348
      %p360 = scmp.eq.s32.totalorder %s39, 1
      %p361 = por %p359, %p360
      %p363 = scmp.ne.s32.totalorder %s348, %s362
      %p364 = scmp.eq.s32.totalorder %s39, 0
      %p365 = por %p363, %p364
      %s367 = sadd.s32 %s366, 1
      %p370 = scmp.eq.s32.totalorder %s33, 1
      %p371 = scmp.ne.s32.totalorder %s366, %s368
      %p372 = scmp.eq.s32.totalorder %s33, 0
      %p373 = por %p371, %p372
      %p374 = scmp.ne.s32.totalorder %s366, %s368
      %p375 = scmp.eq.s32.totalorder %s38, 1
      %p376 = por %p374, %p375
      %p377 = scmp.ne.s32.totalorder %s368, %s369
      %p378 = scmp.eq.s32.totalorder %s38, 0
      %p379 = por %p377, %p378
      %p380 = scmp.ne.s32.totalorder %s368, %s369
      %p381 = scmp.eq.s32.totalorder %s39, 1
      %p382 = por %p380, %p381
      %p384 = scmp.ne.s32.totalorder %s369, %s383
      %p385 = scmp.eq.s32.totalorder %s39, 0
      %p386 = por %p384, %p385
      %s388 = sadd.s32 %s387, 1
      %p391 = scmp.eq.s32.totalorder %s33, 1
      %p392 = scmp.ne.s32.totalorder %s387, %s389
      %p393 = scmp.eq.s32.totalorder %s33, 0
      %p394 = por %p392, %p393
      %p395 = scmp.ne.s32.totalorder %s387, %s389
      %p396 = scmp.eq.s32.totalorder %s38, 1
      %p397 = por %p395, %p396
      %p398 = scmp.ne.s32.totalorder %s389, %s390
      %p399 = scmp.eq.s32.totalorder %s38, 0
      %p400 = por %p398, %p399
      %p401 = scmp.ne.s32.totalorder %s389, %s390
      %p402 = scmp.eq.s32.totalorder %s39, 1
      %p403 = por %p401, %p402
      %p405 = scmp.ne.s32.totalorder %s390, %s404
      %p406 = scmp.eq.s32.totalorder %s39, 0
      %p407 = por %p405, %p406
      %s408 = ssub.s32 %s33, %s40
      %p409 = scmp.eq.s32.totalorder %s408, 0
      %s411 = sadd.s32 %s410, 1
      %s412 = scalar_select %p409, %s410, %s411
      %p415 = pneg %p409
      %p416 = scmp.eq.s32.totalorder %s33, 1
      %p417 = por %p415, %p416
      %p418 = scmp.ne.s32.totalorder %s410, %s413
      %p419 = scmp.eq.s32.totalorder %s33, 0
      %p420 = por %p418, %p419
      %p421 = scmp.ne.s32.totalorder %s410, %s413
      %p422 = scmp.eq.s32.totalorder %s38, 1
      %p423 = por %p421, %p422
      %p424 = scmp.ne.s32.totalorder %s413, %s414
      %p425 = scmp.eq.s32.totalorder %s38, 0
      %p426 = por %p424, %p425
      %p427 = scmp.ne.s32.totalorder %s413, %s414
      %p428 = scmp.eq.s32.totalorder %s39, 1
      %p429 = por %p427, %p428
      %p431 = scmp.ne.s32.totalorder %s414, %s430
      %p432 = scmp.eq.s32.totalorder %s39, 0
      %p433 = por %p431, %p432
      %s434 = ssub.s32 %s33, %s40
      %p435 = scmp.eq.s32.totalorder %s434, 0
      %s437 = sadd.s32 %s436, 1
      %s438 = scalar_select %p435, %s436, %s437
      %p441 = pneg %p435
      %p442 = scmp.eq.s32.totalorder %s33, 1
      %p443 = por %p441, %p442
      %p444 = scmp.ne.s32.totalorder %s436, %s439
      %p445 = scmp.eq.s32.totalorder %s33, 0
      %p446 = por %p444, %p445
      %p447 = scmp.ne.s32.totalorder %s436, %s439
      %p448 = scmp.eq.s32.totalorder %s38, 1
      %p449 = por %p447, %p448
      %p450 = scmp.ne.s32.totalorder %s439, %s440
      %p451 = scmp.eq.s32.totalorder %s38, 0
      %p452 = por %p450, %p451
      %p453 = scmp.ne.s32.totalorder %s439, %s440
      %p454 = scmp.eq.s32.totalorder %s39, 1
      %p455 = por %p453, %p454
      %p457 = scmp.ne.s32.totalorder %s440, %s456
      %p458 = scmp.eq.s32.totalorder %s39, 0
      %p459 = por %p457, %p458
      %p460 = scmp.le.s32.totalorder 1, %s33
      %p461 = scmp.lt.s32.totalorder %s33, 3
      %p462 = pnand %p460, %p461
      %p463 = pneg %p462
      // Predicated region
      $region9: #{tpu_custom_call.1} parent=5 // pred_check
        _
      $region10: #{tpu_custom_call.1} parent=5 // pred_check_branch
        %465 = sbr.rel (%p462) target = $region12
      $region11: #{tpu_custom_call.1} parent=5 // pred_region
        %s466 = ssub.s32 %s33, 1
        // Predicated region
        $region13: #{tpu_custom_call.1} parent=11 // pred_check
          %p467 = pneg %p106
        $region14: #{tpu_custom_call.1} parent=11 // pred_check_branch
          %469 = sbr.rel (%p467) target = $region16
        $region15: #{tpu_custom_call.1} parent=11 // pred_region
          _
        $region16: #{tpu_custom_call.1} parent=11 // pred_fallthru
          _
        // Predicated region
        $region17: #{tpu_custom_call.1} parent=11 // pred_check
          %p470 = pneg %p127
        $region18: #{tpu_custom_call.1} parent=11 // pred_check_branch
          %472 = sbr.rel (%p470) target = $region20
        $region19: #{tpu_custom_call.1} parent=11 // pred_region
          _
        $region20: #{tpu_custom_call.1} parent=11 // pred_fallthru
          _
        // Predicated region
        $region21: #{tpu_custom_call.1} parent=11 // pred_check
          %p473 = pneg %p148
        $region22: #{tpu_custom_call.1} parent=11 // pred_check_branch
          %475 = sbr.rel (%p473) target = $region24
        $region23: #{tpu_custom_call.1} parent=11 // pred_region
          %477 = vsyncadd [#allocation5], 0
          %s478 = sshll.u32 %s4, 4
          %s479 = int_to_ptr.hbm [resolvable:$true] %s478
          %s480 = sshll.u32 [#allocation4], 4
          %s481 = int_to_ptr.vmem [resolvable:$true] %s480
          %486 = dma.hbm_to_vmem [thread:$0]  %s479, 512, %s481, [#allocation5], 64, 64, 4
        $region24: #{tpu_custom_call.1} parent=11 // pred_fallthru
          _
        // Predicated region
        $region25: #{tpu_custom_call.1} parent=11 // pred_check
          %p487 = pneg %p169
        $region26: #{tpu_custom_call.1} parent=11 // pred_check_branch
          %489 = sbr.rel (%p487) target = $region28
        $region27: #{tpu_custom_call.1} parent=11 // pred_region
          %491 = vsyncadd [#allocation5], 0
          %s492 = sshll.u32 %s5, 4
          %s493 = int_to_ptr.hbm [resolvable:$true] %s492
          %s494 = sshll.u32 [#allocation6], 4
          %s495 = int_to_ptr.vmem [resolvable:$true] %s494
          %500 = dma.hbm_to_vmem [thread:$0]  %s493, 512, %s495, [#allocation5], 64, 64, 4
        $region28: #{tpu_custom_call.1} parent=11 // pred_fallthru
          _
        // Predicated region
        $region29: #{tpu_custom_call.1} parent=11 // pred_check
          %p501 = pneg %p190
        $region30: #{tpu_custom_call.1} parent=11 // pred_check_branch
          %503 = sbr.rel (%p501) target = $region32
        $region31: #{tpu_custom_call.1} parent=11 // pred_region
          %505 = vsyncadd [#allocation8], 0
          %s506 = sshll.u32 %s6, 4
          %s507 = int_to_ptr.hbm [resolvable:$true] %s506
          %s508 = sshll.u32 [#allocation7], 4
          %s509 = int_to_ptr.vmem [resolvable:$true] %s508
          %514 = dma.hbm_to_vmem [thread:$0]  %s507, 512, %s509, [#allocation8], 64, 64, 4
        $region32: #{tpu_custom_call.1} parent=11 // pred_fallthru
          _
        // Predicated region
        $region33: #{tpu_custom_call.1} parent=11 // pred_check
          %p515 = pneg %p211
        $region34: #{tpu_custom_call.1} parent=11 // pred_check_branch
          %517 = sbr.rel (%p515) target = $region36
        $region35: #{tpu_custom_call.1} parent=11 // pred_region
          %519 = vsyncadd [#allocation8], 0
          %s520 = sshll.u32 %s7, 4
          %s521 = int_to_ptr.hbm [resolvable:$true] %s520
          %s522 = sshll.u32 [#allocation9], 4
          %s523 = int_to_ptr.vmem [resolvable:$true] %s522
          %528 = dma.hbm_to_vmem [thread:$0]  %s521, 512, %s523, [#allocation8], 64, 64, 4
        $region36: #{tpu_custom_call.1} parent=11 // pred_fallthru
          _
        // Predicated region
        $region37: #{tpu_custom_call.1} parent=11 // pred_check
          %p529 = pneg %p232
        $region38: #{tpu_custom_call.1} parent=11 // pred_check_branch
          %531 = sbr.rel (%p529) target = $region40
        $region39: #{tpu_custom_call.1} parent=11 // pred_region
          _
        $region40: #{tpu_custom_call.1} parent=11 // pred_fallthru
          _
        // Predicated region
        $region41: #{tpu_custom_call.1} parent=11 // pred_check
          %p532 = pneg %p253
        $region42: #{tpu_custom_call.1} parent=11 // pred_check_branch
          %534 = sbr.rel (%p532) target = $region44
        $region43: #{tpu_custom_call.1} parent=11 // pred_region
          %536 = vsyncadd [#allocation11], 0
          %s537 = sshll.u32 %s9, 4
          %s538 = int_to_ptr.hbm [resolvable:$true] %s537
          %s539 = sshll.u32 [#allocation10], 4
          %s540 = int_to_ptr.vmem [resolvable:$true] %s539
          %545 = dma.hbm_to_vmem [thread:$0]  %s538, 32, %s540, [#allocation11], 16, 16, 1
        $region44: #{tpu_custom_call.1} parent=11 // pred_fallthru
          _
        // Predicated region
        $region45: #{tpu_custom_call.1} parent=11 // pred_check
          %p546 = pneg %p274
        $region46: #{tpu_custom_call.1} parent=11 // pred_check_branch
          %548 = sbr.rel (%p546) target = $region48
        $region47: #{tpu_custom_call.1} parent=11 // pred_region
          %550 = vsyncadd [#allocation11], 0
          %s551 = sshll.u32 %s10, 4
          %s552 = int_to_ptr.hbm [resolvable:$true] %s551
          %s553 = sshll.u32 [#allocation12], 4
          %s554 = int_to_ptr.vmem [resolvable:$true] %s553
          %559 = dma.hbm_to_vmem [thread:$0]  %s552, 512, %s554, [#allocation11], 64, 64, 4
        $region48: #{tpu_custom_call.1} parent=11 // pred_fallthru
          _
        // Predicated region
        $region49: #{tpu_custom_call.1} parent=11 // pred_check
          %p560 = pneg %p295
        $region50: #{tpu_custom_call.1} parent=11 // pred_check_branch
          %562 = sbr.rel (%p560) target = $region52
        $region51: #{tpu_custom_call.1} parent=11 // pred_region
          %564 = vsyncadd [#allocation14], 0
          %s565 = sshll.u32 %s11, 4
          %s566 = int_to_ptr.hbm [resolvable:$true] %s565
          %s567 = sshll.u32 [#allocation13], 4
          %s568 = int_to_ptr.vmem [resolvable:$true] %s567
          %573 = dma.hbm_to_vmem [thread:$0]  %s566, 32, %s568, [#allocation14], 16, 16, 1
        $region52: #{tpu_custom_call.1} parent=11 // pred_fallthru
          _
        // Predicated region
        $region53: #{tpu_custom_call.1} parent=11 // pred_check
          %p574 = pneg %p316
        $region54: #{tpu_custom_call.1} parent=11 // pred_check_branch
          %576 = sbr.rel (%p574) target = $region56
        $region55: #{tpu_custom_call.1} parent=11 // pred_region
          %578 = vsyncadd [#allocation14], 0
          %s579 = sshll.u32 %s12, 4
          %s580 = int_to_ptr.hbm [resolvable:$true] %s579
          %s581 = sshll.u32 [#allocation15], 4
          %s582 = int_to_ptr.vmem [resolvable:$true] %s581
          %587 = dma.hbm_to_vmem [thread:$0]  %s580, 512, %s582, [#allocation14], 64, 64, 4
        $region56: #{tpu_custom_call.1} parent=11 // pred_fallthru
          _
        // Predicated region
        $region57: #{tpu_custom_call.1} parent=11 // pred_check
          %p588 = pneg %p337
        $region58: #{tpu_custom_call.1} parent=11 // pred_check_branch
          %590 = sbr.rel (%p588) target = $region60
        $region59: #{tpu_custom_call.1} parent=11 // pred_region
          %592 = vsyncadd [#allocation17], 0
          %s593 = sshll.u32 %s13, 4
          %s594 = int_to_ptr.hbm [resolvable:$true] %s593
          %s595 = sshll.u32 [#allocation16], 4
          %s596 = int_to_ptr.vmem [resolvable:$true] %s595
          %601 = dma.hbm_to_vmem [thread:$0]  %s594, 32, %s596, [#allocation17], 16, 16, 1
        $region60: #{tpu_custom_call.1} parent=11 // pred_fallthru
          _
        // Predicated region
        $region61: #{tpu_custom_call.1} parent=11 // pred_check
          %p602 = pneg %p358
        $region62: #{tpu_custom_call.1} parent=11 // pred_check_branch
          %604 = sbr.rel (%p602) target = $region64
        $region63: #{tpu_custom_call.1} parent=11 // pred_region
          %606 = vsyncadd [#allocation17], 0
          %s608 = sshll.u32 %s14, 4
          %s609 = int_to_ptr.hbm [resolvable:$true] %s608
          %s610 = sshll.u32 [#allocation18], 4
          %s611 = int_to_ptr.vmem [resolvable:$true] %s610
          %613 = dma.hbm_to_vmem [thread:$0]  %s609, 16, %s611, [#allocation17]
        $region64: #{tpu_custom_call.1} parent=11 // pred_fallthru
          _
        // Predicated region
        $region65: #{tpu_custom_call.1} parent=11 // pred_check
          %p614 = pneg %p379
        $region66: #{tpu_custom_call.1} parent=11 // pred_check_branch
          %616 = sbr.rel (%p614) target = $region68
        $region67: #{tpu_custom_call.1} parent=11 // pred_region
          %618 = vsyncadd [#allocation20], 0
          %s620 = sshll.u32 %s15, 4
          %s621 = int_to_ptr.hbm [resolvable:$true] %s620
          %s622 = sshll.u32 [#allocation19], 4
          %s623 = int_to_ptr.vmem [resolvable:$true] %s622
          %625 = dma.hbm_to_vmem [thread:$0]  %s621, 16, %s623, [#allocation20]
        $region68: #{tpu_custom_call.1} parent=11 // pred_fallthru
          _
        // Predicated region
        $region69: #{tpu_custom_call.1} parent=11 // pred_check
          %p626 = pneg %p400
        $region70: #{tpu_custom_call.1} parent=11 // pred_check_branch
          %628 = sbr.rel (%p626) target = $region72
        $region71: #{tpu_custom_call.1} parent=11 // pred_region
          _
        $region72: #{tpu_custom_call.1} parent=11 // pred_fallthru
          _
      $region12: #{tpu_custom_call.1} parent=5 // pred_fallthru
        _
      %p629 = scmp.lt.s32.totalorder %s33, 2
      // Predicated region
      $region73: #{tpu_custom_call.1} parent=5 // pred_check
        %p630 = pneg %p629
      $region74: #{tpu_custom_call.1} parent=5 // pred_check_branch
        %632 = sbr.rel (%p630) target = $region76
      $region75: #{tpu_custom_call.1} parent=5 // pred_region
        // Predicated region
        $region77: #{tpu_custom_call.1} parent=75 // pred_check
          %p633 = pneg %p53
        $region78: #{tpu_custom_call.1} parent=75 // pred_check_branch
          %635 = sbr.rel (%p633) target = $region80
        $region79: #{tpu_custom_call.1} parent=75 // pred_region
          %s636 = sand.u32 %s43, 1
          %s637 = scalar_lea.sflag [#allocation3], %s636
          %s638 = sand.u32 %s43, 1
          %s639 = smul.addr %s638, 8
          %s640 = scalar_lea.vmem [#allocation2], %s639
          %642 = vsyncadd %s637, 0
          %s643 = smul.addr %s33, 8
          %s644 = scalar_lea.hbm %s0, %s643
          %s646 = sshll.u32 %s644, 4
          %s647 = int_to_ptr.hbm [resolvable:$true] %s646
          %s648 = sshll.u32 %s640, 4
          %s649 = int_to_ptr.vmem [resolvable:$true] %s648
          %651 = dma.hbm_to_vmem [thread:$0]  %s647, 128, %s649, %s637
        $region80: #{tpu_custom_call.1} parent=75 // pred_fallthru
          _
        // Predicated region
        $region81: #{tpu_custom_call.1} parent=75 // pred_check
          %p652 = pneg %p79
        $region82: #{tpu_custom_call.1} parent=75 // pred_check_branch
          %654 = sbr.rel (%p652) target = $region84
        $region83: #{tpu_custom_call.1} parent=75 // pred_region
          %p655 = scmp.lt.s32.totalorder %s33, 1
          %s656 = scalar_select %p655, %s33, 1
          %s657 = smul.addr %s656, 8
          %s658 = scalar_lea.vmem %s1, %s657
        $region84: #{tpu_custom_call.1} parent=75 // pred_fallthru
          _
        // Predicated region
        $region85: #{tpu_custom_call.1} parent=75 // pred_check
          %p659 = pneg %p420
        $region86: #{tpu_custom_call.1} parent=75 // pred_check_branch
          %661 = sbr.rel (%p659) target = $region88
        $region87: #{tpu_custom_call.1} parent=75 // pred_region
          %s662 = sand.u32 %s410, 1
          %s663 = sand.u32 %s410, 1
          %s664 = smul.addr %s663, 12
          %s665 = scalar_lea.vmem [#allocation21], %s664
          %s666 = smul.addr %s33, 4
          %s667 = scalar_lea.vmem %s17, %s666
          // Predicated region
          $region89: #{tpu_custom_call.1} parent=87 // pred_check
            _
          $region90: #{tpu_custom_call.1} parent=87 // pred_check_branch
            %669 = sbr.rel (0) target = $region92
          $region91: #{tpu_custom_call.1} parent=87 // pred_region
            // Predicated region
            $region93: #{tpu_custom_call.1} parent=91 // pred_check
              _
            $region94: #{tpu_custom_call.1} parent=91 // pred_check_branch
              %671 = sbr.rel target = $region96
            $region95: #{tpu_custom_call.1} parent=91 // pred_region
              // Predicated region
              $region108: #{tpu_custom_call.1} parent=95 // pred_check
                _
              $region109: #{tpu_custom_call.1} parent=95 // pred_check_branch
                %691 = sbr.rel (0) target = $region111
              $region110: #{tpu_custom_call.1} parent=95 // pred_region
                loop: start=0, step=1, limit=1
                $region112: #{tpu_custom_call.1} parent=110 // loop_pre_header
                  _
                $region113: #{tpu_custom_call.1} parent=110 // loop_header
                  %s693 = sphi 0, %s697
                  %p694 = scmp.ge.s32.totalorder %s693, 1
                  %s698 = sphi %s667, %s667
                  %s699 = sphi %s665, %s665
                $region114: #{tpu_custom_call.1} parent=110 // loop_header_branch
                  %696 = sbr.rel (%p694) target = $region118
                $region115: #{tpu_custom_call.1} parent=110 // loop_body
                  _
                $region116: #{tpu_custom_call.1} parent=110 // loop_footer
                  %s697 = sadd.s32 1, %s693
                $region117: #{tpu_custom_call.1} parent=110 // loop_footer_branch
                  %692 = sbr.rel target = $region113
                $region118: #{tpu_custom_call.1} parent=110 // loop_exit
                  _
                %s701 = ssub.s32 16, 1
                loop: start=0, step=1, limit=1
                $region119: #{tpu_custom_call.1} parent=110 // loop_pre_header
                  _
                $region120: #{tpu_custom_call.1} parent=110 // loop_header
                  %s703 = sphi 0, %s707
                  %p704 = scmp.ge.s32.totalorder %s703, 1
                  %s708 = sphi %s667, %s667
                  %s709 = sphi %s665, %s665
                $region121: #{tpu_custom_call.1} parent=110 // loop_header_branch
                  %706 = sbr.rel (%p704) target = $region125
                $region122: #{tpu_custom_call.1} parent=110 // loop_body
                  %v710 = vld [vmem:[%s708] sm:%s701]
                  %711 = vst [vmem:[%s709] sm:%s701] %v710
                  %v712 = vld [vmem:[%s708 + $0x8] sm:%s701]
                  %713 = vst [vmem:[%s709 + $0x4] sm:%s701] %v712
                  %v714 = vld [vmem:[%s708 + $0x10] sm:%s701]
                  %715 = vst [vmem:[%s709 + $0x8] sm:%s701] %v714
                $region123: #{tpu_custom_call.1} parent=110 // loop_footer
                  %s707 = sadd.s32 1, %s703
                $region124: #{tpu_custom_call.1} parent=110 // loop_footer_branch
                  %702 = sbr.rel target = $region120
                $region125: #{tpu_custom_call.1} parent=110 // loop_exit
                  _
              $region111: #{tpu_custom_call.1} parent=95 // pred_fallthru
                _
            $region96: #{tpu_custom_call.1} parent=91 // pred_fallthru
              _
            // Predicated region
            $region97: #{tpu_custom_call.1} parent=91 // pred_check
              _
            $region98: #{tpu_custom_call.1} parent=91 // pred_check_branch
              %673 = sbr.rel (0) target = $region100
            $region99: #{tpu_custom_call.1} parent=91 // pred_region
              %s675 = ssub.s32 16, 1
              loop: start=0, step=1, limit=1
              $region101: #{tpu_custom_call.1} parent=99 // loop_pre_header
                _
              $region102: #{tpu_custom_call.1} parent=99 // loop_header
                %s677 = sphi 0, %s681
                %p678 = scmp.ge.s32.totalorder %s677, 1
                %s682 = sphi %s667, %s667
                %s683 = sphi %s665, %s665
              $region103: #{tpu_custom_call.1} parent=99 // loop_header_branch
                %680 = sbr.rel (%p678) target = $region107
              $region104: #{tpu_custom_call.1} parent=99 // loop_body
                %v684 = vld [vmem:[%s682] sm:%s675]
                %685 = vst [vmem:[%s683] sm:%s675] %v684
                %v686 = vld [vmem:[%s682 + $0x8] sm:%s675]
                %687 = vst [vmem:[%s683 + $0x4] sm:%s675] %v686
                %v688 = vld [vmem:[%s682 + $0x10] sm:%s675]
                %689 = vst [vmem:[%s683 + $0x8] sm:%s675] %v688
              $region105: #{tpu_custom_call.1} parent=99 // loop_footer
                %s681 = sadd.s32 1, %s677
              $region106: #{tpu_custom_call.1} parent=99 // loop_footer_branch
                %676 = sbr.rel target = $region102
              $region107: #{tpu_custom_call.1} parent=99 // loop_exit
                _
            $region100: #{tpu_custom_call.1} parent=91 // pred_fallthru
              _
          $region92: #{tpu_custom_call.1} parent=87 // pred_fallthru
            _
          %716 = vnop
        $region88: #{tpu_custom_call.1} parent=75 // pred_fallthru
          _
      $region76: #{tpu_custom_call.1} parent=5 // pred_fallthru
        _
      %p717 = scmp.le.s32.totalorder 1, %s33
      %p718 = scmp.lt.s32.totalorder %s33, 3
      %p719 = pnand %p717, %p718
      %p720 = pneg %p719
      // Predicated region
      $region126: #{tpu_custom_call.1} parent=5 // pred_check
        _
      $region127: #{tpu_custom_call.1} parent=5 // pred_check_branch
        %722 = sbr.rel (%p719) target = $region129
      $region128: #{tpu_custom_call.1} parent=5 // pred_region
        %s723 = ssub.s32 %s33, 1
        %s724 = sand.u32 %s46, 1
        %s725 = scalar_lea.sflag [#allocation3], %s724
        %s726 = sand.u32 %s46, 1
        %s727 = smul.addr %s726, 8
        %s728 = scalar_lea.vmem [#allocation2], %s727
        // Predicated region
        $region130: #{tpu_custom_call.1} parent=128 // pred_check
          %p729 = pneg %p59
        $region131: #{tpu_custom_call.1} parent=128 // pred_check_branch
          %731 = sbr.rel (%p729) target = $region133
        $region132: #{tpu_custom_call.1} parent=128 // pred_region
          %733 = dma.done %s725, 128
        $region133: #{tpu_custom_call.1} parent=128 // pred_fallthru
          _
        // Predicated region
        $region134: #{tpu_custom_call.1} parent=128 // pred_check
          %p734 = pneg %p148
        $region135: #{tpu_custom_call.1} parent=128 // pred_check_branch
          %736 = sbr.rel (%p734) target = $region137
        $region136: #{tpu_custom_call.1} parent=128 // pred_region
          %738 = dma.done [#allocation5], 512
        $region137: #{tpu_custom_call.1} parent=128 // pred_fallthru
          _
        // Predicated region
        $region138: #{tpu_custom_call.1} parent=128 // pred_check
          %p739 = pneg %p169
        $region139: #{tpu_custom_call.1} parent=128 // pred_check_branch
          %741 = sbr.rel (%p739) target = $region141
        $region140: #{tpu_custom_call.1} parent=128 // pred_region
          %743 = dma.done [#allocation5], 512
        $region141: #{tpu_custom_call.1} parent=128 // pred_fallthru
          _
        // Predicated region
        $region142: #{tpu_custom_call.1} parent=128 // pred_check
          %p744 = pneg %p190
        $region143: #{tpu_custom_call.1} parent=128 // pred_check_branch
          %746 = sbr.rel (%p744) target = $region145
        $region144: #{tpu_custom_call.1} parent=128 // pred_region
          %748 = dma.done [#allocation8], 512
        $region145: #{tpu_custom_call.1} parent=128 // pred_fallthru
          _
        // Predicated region
        $region146: #{tpu_custom_call.1} parent=128 // pred_check
          %p749 = pneg %p211
        $region147: #{tpu_custom_call.1} parent=128 // pred_check_branch
          %751 = sbr.rel (%p749) target = $region149
        $region148: #{tpu_custom_call.1} parent=128 // pred_region
          %753 = dma.done [#allocation8], 512
        $region149: #{tpu_custom_call.1} parent=128 // pred_fallthru
          _
        // Predicated region
        $region150: #{tpu_custom_call.1} parent=128 // pred_check
          %p754 = pneg %p253
        $region151: #{tpu_custom_call.1} parent=128 // pred_check_branch
          %756 = sbr.rel (%p754) target = $region153
        $region152: #{tpu_custom_call.1} parent=128 // pred_region
          %758 = dma.done [#allocation11], 32
        $region153: #{tpu_custom_call.1} parent=128 // pred_fallthru
          _
        // Predicated region
        $region154: #{tpu_custom_call.1} parent=128 // pred_check
          %p759 = pneg %p274
        $region155: #{tpu_custom_call.1} parent=128 // pred_check_branch
          %761 = sbr.rel (%p759) target = $region157
        $region156: #{tpu_custom_call.1} parent=128 // pred_region
          %763 = dma.done [#allocation11], 512
        $region157: #{tpu_custom_call.1} parent=128 // pred_fallthru
          _
        // Predicated region
        $region158: #{tpu_custom_call.1} parent=128 // pred_check
          %p764 = pneg %p295
        $region159: #{tpu_custom_call.1} parent=128 // pred_check_branch
          %766 = sbr.rel (%p764) target = $region161
        $region160: #{tpu_custom_call.1} parent=128 // pred_region
          %768 = dma.done [#allocation14], 32
        $region161: #{tpu_custom_call.1} parent=128 // pred_fallthru
          _
        // Predicated region
        $region162: #{tpu_custom_call.1} parent=128 // pred_check
          %p769 = pneg %p316
        $region163: #{tpu_custom_call.1} parent=128 // pred_check_branch
          %771 = sbr.rel (%p769) target = $region165
        $region164: #{tpu_custom_call.1} parent=128 // pred_region
          %773 = dma.done [#allocation14], 512
        $region165: #{tpu_custom_call.1} parent=128 // pred_fallthru
          _
        // Predicated region
        $region166: #{tpu_custom_call.1} parent=128 // pred_check
          %p774 = pneg %p337
        $region167: #{tpu_custom_call.1} parent=128 // pred_check_branch
          %776 = sbr.rel (%p774) target = $region169
        $region168: #{tpu_custom_call.1} parent=128 // pred_region
          %778 = dma.done [#allocation17], 32
        $region169: #{tpu_custom_call.1} parent=128 // pred_fallthru
          _
        // Predicated region
        $region170: #{tpu_custom_call.1} parent=128 // pred_check
          %p779 = pneg %p358
        $region171: #{tpu_custom_call.1} parent=128 // pred_check_branch
          %781 = sbr.rel (%p779) target = $region173
        $region172: #{tpu_custom_call.1} parent=128 // pred_region
          %783 = dma.done [#allocation17], 16
        $region173: #{tpu_custom_call.1} parent=128 // pred_fallthru
          _
        // Predicated region
        $region174: #{tpu_custom_call.1} parent=128 // pred_check
          %p784 = pneg %p379
        $region175: #{tpu_custom_call.1} parent=128 // pred_check_branch
          %786 = sbr.rel (%p784) target = $region177
        $region176: #{tpu_custom_call.1} parent=128 // pred_region
          %788 = dma.done [#allocation20], 16
        $region177: #{tpu_custom_call.1} parent=128 // pred_fallthru
          _
        %s789 = sand.u32 %s413, 1
        %s790 = sand.u32 %s413, 1
        %s791 = smul.addr %s790, 12
        %s792 = scalar_lea.vmem [#allocation21], %s791
        // Predicated region
        $region178: #{tpu_custom_call.1} parent=128 // pred_check
          %p793 = pneg %p426
        $region179: #{tpu_custom_call.1} parent=128 // pred_check_branch
          %795 = sbr.rel (%p793) target = $region181
        $region180: #{tpu_custom_call.1} parent=128 // pred_region
          _
        $region181: #{tpu_custom_call.1} parent=128 // pred_fallthru
          _
        %s796 = sand.u32 %s46, 1
        %s797 = scalar_lea.sflag [#allocation3], %s796
        %s798 = sand.u32 %s46, 1
        %s799 = smul.addr %s798, 8
        %s800 = scalar_lea.vmem [#allocation2], %s799
        %p801 = pneg %p59
        %p802 = pneg %p56
        %p803 = scmp.lt.s32.totalorder %s38, 1
        %s804 = scalar_select %p803, %s38, 1
        %s805 = smul.addr %s804, 8
        %s806 = scalar_lea.vmem %s1, %s805
        %p807 = pneg %p85
        %p808 = pneg %p82
        %p809 = pneg %p106
        %p810 = pneg %p103
        %p811 = pneg %p127
        %p812 = pneg %p124
        %p813 = pneg %p148
        %p814 = pneg %p145
        %p815 = pneg %p169
        %p816 = pneg %p166
        %p817 = pneg %p190
        %p818 = pneg %p187
        %p819 = pneg %p211
        %p820 = pneg %p208
        %p821 = pneg %p232
        %p822 = pneg %p229
        %p823 = pneg %p253
        %p824 = pneg %p250
        %p825 = pneg %p274
        %p826 = pneg %p271
        %p827 = pneg %p295
        %p828 = pneg %p292
        %p829 = pneg %p316
        %p830 = pneg %p313
        %p831 = pneg %p337
        %p832 = pneg %p334
        %p833 = pneg %p358
        %p834 = pneg %p355
        %p835 = pneg %p379
        %p836 = pneg %p376
        %p837 = pneg %p400
        %p838 = pneg %p397
        %s839 = sand.u32 %s413, 1
        %s840 = sand.u32 %s413, 1
        %s841 = smul.addr %s840, 12
        %s842 = scalar_lea.vmem [#allocation21], %s841
        %p843 = pneg %p426
        %p844 = pneg %p423
        %p845 = pneg %p452
        %p846 = pneg %p449
        %p847 = scmp.lt.s32.totalorder %s38, 1
        %s848 = scalar_select %p847, %s38, 1
        %s849 = smul.addr %s848, 8
        %s850 = scalar_lea.vmem %s18, %s849
        %p851 = scmp.lt.s32.totalorder %s38, 1
        %s852 = scalar_select %p851, %s38, 1
        %s853 = smul.addr %s852, 8
        %s854 = scalar_lea.vmem %s1, %s853
        %p855 = scmp.lt.s32.totalorder %s38, 1
        %s856 = scalar_select %p855, %s38, 1
        %s857 = smul.addr %s856, 8
        %s858 = scalar_lea.vmem %s18, %s857
        %v860 = vld [vmem:[%s728] sm:$0xff]
        %v861 = vld [vmem:[%s854] sm:$0xff]
        %v862 = vlaneseq
        %v863 = vshrl.u32 %v862, 7
        %v864 = vlaneseq
        %v865 = vand.u32 %v864, 127
        %vm866 = vcmp.le.s32.totalorder %v865, %v863
        %v867 = vsel %vm866, 0.0, -inf
        %v868 = vld [vmem:[%s2] sm:$0x1]
        %v869 = vld [vmem:[%s3] sm:$0x1]
        %vm870 = vcmask 261120
        %v871 = vsel %vm870, %v860, 0.0
        %872 = vadd.xlane.f32.xlu0 %v871
        %v873 = vpop.xlane.xlu0 %872
        %v874 = vrcp.pop 32.0
        %v875 = vmul.f32 32.0, %v874
        %v876 = vsub.f32 1.0, %v875
        %v877 = vmul.f32 %v874, %v876
        %v878 = vadd.f32 %v874, %v877
        %vm879 = vweird.f32 %v874
        %v880 = vsel %vm879, %v874, %v878
        %v881 = vmul.f32 %v873, %v880
        %v882 = vsub.f32 %v860, %v881
        %v883 = vmul.f32 %v882, %v882
        %v884 = vsel %vm870, %v883, 0.0
        %885 = vadd.xlane.f32.xlu0 %v884
        %v886 = vpop.xlane.xlu0 %885
        %v887 = vmul.f32 %v886, %v880
        %v888 = vadd.f32 %v887, 1e-08
        %v889 = vrsqrt.pop %v888
        %v890 = vmul.f32 %v889, %v888
        %v891 = vmul.f32 %v890, %v889
        %v892 = vmul.f32 0.5, %v891
        %v893 = vsub.f32 1.5, %v892
        %v894 = vmul.f32 %v889, %v893
        %vm895 = vweird.f32 %v888
        %vm896 = vweird.f32 %v889
        %vm897 = vmor %vm895, %vm896
        %v898 = vsel %vm897, %v889, %v894
        %v899 = vmul.f32 %v882, %v898
        %v901 = vperm.slane %v868, 0
        %v903 = vmul.f32 %v899, %v901
        %v905 = vperm.slane %v869, 0
        %v907 = vadd.f32 %v903, %v905
        %v908 = vpack.c.bf16 %v860, %v860
        %v909 = vpack.c.bf16 %v907, %v907
        %v910 = vld [vmem:[#allocation4] sm:$0xf]
        %v911 = vld [vmem:[#allocation4 + $0x4] sm:$0xf]
        %v912 = vld [vmem:[#allocation4 + $0x8] sm:$0xf]
        %v913 = vld [vmem:[#allocation4 + $0xc] sm:$0xf]
        %v918 = vunpack.c.l.b16 %v910
        %v919 = vunpack.c.l.b16 %v911
        %v920 = vunpack.c.l.b16 %v912
        %v921 = vunpack.c.l.b16 %v913
        %v922 = vpack.c.b16 %v919, %v918
        %v923 = vpack.c.b16 %v921, %v920
        %v927 = vsel %vm870, %v909, 0
        %929 = vmatpush.bf16.msra.mxu0 0
        %930 = vmatpush.bf16.msra.mxu0 0
        %931 = vmatpush.bf16.msra.mxu0 0
        %932 = vmatpush.bf16.msra.mxu0 0
        %933 = vmatpush.bf16.msra.mxu0 0
        %934 = vmatpush.bf16.msra.mxu0 0
        %935 = vmatpush.bf16.msra.mxu0 %v923
        %936 = vmatpush.bf16.msra.mxu0 %v922
        %937 = vmatmul.bf16.gmra.mxu0 %v927
        %v938 = vpop.f32.mrf.mxu0
        %v939 = vadd.f32 0.0, %v938
        %v940 = vpop.f32.mrf.mxu0
        %941 = vdwg.mxu0
        %v942 = vld [vmem:[#allocation6] sm:$0xf]
        %v943 = vld [vmem:[#allocation6 + $0x4] sm:$0xf]
        %v944 = vld [vmem:[#allocation6 + $0x8] sm:$0xf]
        %v945 = vld [vmem:[#allocation6 + $0xc] sm:$0xf]
        %v950 = vunpack.c.l.b16 %v942
        %v951 = vunpack.c.l.b16 %v943
        %v952 = vunpack.c.l.b16 %v944
        %v953 = vunpack.c.l.b16 %v945
        %v954 = vpack.c.b16 %v951, %v950
        %v955 = vpack.c.b16 %v953, %v952
        %v959 = vsel %vm870, %v908, 0
        %961 = vmatpush.bf16.msra.mxu0 0
        %962 = vmatpush.bf16.msra.mxu0 0
        %963 = vmatpush.bf16.msra.mxu0 0
        %964 = vmatpush.bf16.msra.mxu0 0
        %965 = vmatpush.bf16.msra.mxu0 0
        %966 = vmatpush.bf16.msra.mxu0 0
        %967 = vmatpush.bf16.msra.mxu0 %v955
        %968 = vmatpush.bf16.msra.mxu0 %v954
        %969 = vmatmul.bf16.gmra.mxu0 %v959
        %v970 = vpop.f32.mrf.mxu0
        %v971 = vadd.f32 0.0, %v970
        %v972 = vpop.f32.mrf.mxu0
        %973 = vdwg.mxu0
        %v974 = vld [vmem:[#allocation7] sm:$0xf]
        %v975 = vld [vmem:[#allocation7 + $0x4] sm:$0xf]
        %v976 = vld [vmem:[#allocation7 + $0x8] sm:$0xf]
        %v977 = vld [vmem:[#allocation7 + $0xc] sm:$0xf]
        %v982 = vunpack.c.l.b16 %v974
        %v983 = vunpack.c.l.b16 %v975
        %v984 = vunpack.c.l.b16 %v976
        %v985 = vunpack.c.l.b16 %v977
        %v986 = vpack.c.b16 %v983, %v982
        %v987 = vpack.c.b16 %v985, %v984
        %990 = vmatpush.bf16.msra.mxu0 0
        %991 = vmatpush.bf16.msra.mxu0 0
        %992 = vmatpush.bf16.msra.mxu0 0
        %993 = vmatpush.bf16.msra.mxu0 0
        %994 = vmatpush.bf16.msra.mxu0 0
        %995 = vmatpush.bf16.msra.mxu0 0
        %996 = vmatpush.bf16.msra.mxu0 %v987
        %997 = vmatpush.bf16.msra.mxu0 %v986
        %998 = vmatmul.bf16.gmra.mxu0 %v959
        %v999 = vpop.f32.mrf.mxu0
        %v1000 = vadd.f32 0.0, %v999
        %v1001 = vpop.f32.mrf.mxu0
        %1002 = vdwg.mxu0
        %v1003 = vpack.c.bf16 %v939, %v939
        %v1004 = vpack.c.bf16 %v971, %v971
        %v1005 = vpack.c.bf16 %v1000, %v1000
        %vm1006 = vcmask 130048
        %v1008 = vsel %vm1006, %v1003, 0
        %v1011 = vsel %vm1006, %v1004, 0
        %1013 = vmatpush.bf16.xpose.msra.mxu0 0
        %1014 = vmatpush.bf16.xpose.msra.mxu0 0
        %1015 = vmatpush.bf16.xpose.msra.mxu0 0
        %1016 = vmatpush.bf16.xpose.msra.mxu0 0
        %1017 = vmatpush.bf16.xpose.msra.mxu0 0
        %1018 = vmatpush.bf16.xpose.msra.mxu0 0
        %1019 = vmatpush.bf16.xpose.msra.mxu0 0
        %1020 = vmatpush.bf16.xpose.msra.mxu0 %v1011
        %1021 = vmatmul.bf16.gmra.mxu0 %v1008
        %v1022 = vpop.f32.mrf.mxu0
        %v1023 = vadd.f32 0.0, %v1022
        %v1024 = vpop.f32.mrf.mxu0
        %1025 = vdwg.mxu0
        %v1026 = vmul.f32 %v1023, 0.25
        %v1027 = vadd.f32 %v1026, %v867
        %vm1028 = vcmask 64512
        %v1029 = vsel %vm1028, %v1027, -inf
        %1030 = vmax.xlane.f32.xlu0 %v1029
        %v1031 = vpop.xlane.xlu0 %1030
        %v1032 = vsub.f32 %v1027, %v1031
        %v1033 = vmul.f32 %v1032, 1.442695
        %v1034 = vpow.pop %v1033
        %v1035 = vsel %vm1028, %v1034, 0.0
        %1036 = vadd.xlane.f32.xlu0 %v1035
        %v1037 = vpop.xlane.xlu0 %1036
        %v1038 = vrcp.pop %v1037
        %v1039 = vmul.f32 %v1034, %v1038
        %v1040 = vpack.c.bf16 %v1039, %v1039
        %v1042 = vsel %vm1028, %v1040, 0
        %vm1044 = vcmask 1043456
        %v1046 = vsel %vm1044, %v1005, 0
        %1048 = vmatpush.bf16.msra.mxu0 0
        %1049 = vmatpush.bf16.msra.mxu0 0
        %1050 = vmatpush.bf16.msra.mxu0 0
        %1051 = vmatpush.bf16.msra.mxu0 0
        %1052 = vmatpush.bf16.msra.mxu0 0
        %1053 = vmatpush.bf16.msra.mxu0 0
        %1054 = vmatpush.bf16.msra.mxu0 0
        %1055 = vmatpush.bf16.msra.mxu0 %v1046
        %1056 = vmatmul.bf16.gmra.mxu0 %v1042
        %v1057 = vpop.f32.mrf.mxu0
        %v1058 = vadd.f32 0.0, %v1057
        %v1059 = vpop.f32.mrf.mxu0
        %1060 = vdwg.mxu0
        %v1062 = vunpack.c.l.b16 %v1003
        %v1063 = vpack.c.b16 %v1062, %v1062
        %1064 = vrot.lane.b32.xlu0 %v1063, 112
        %v1065 = vpop.permute.xlu0 %1064
        %v1067 = vunpack.c.l.b16 %v1004
        %v1068 = vpack.c.b16 %v1067, %v1067
        %1069 = vrot.lane.b32.xlu0 %v1068, 112
        %v1070 = vpop.permute.xlu0 %1069
        %v1072 = vsel %vm1006, %v1065, 0
        %v1075 = vsel %vm1006, %v1070, 0
        %1077 = vmatpush.bf16.xpose.msra.mxu0 0
        %1078 = vmatpush.bf16.xpose.msra.mxu0 0
        %1079 = vmatpush.bf16.xpose.msra.mxu0 0
        %1080 = vmatpush.bf16.xpose.msra.mxu0 0
        %1081 = vmatpush.bf16.xpose.msra.mxu0 0
        %1082 = vmatpush.bf16.xpose.msra.mxu0 0
        %1083 = vmatpush.bf16.xpose.msra.mxu0 0
        %1084 = vmatpush.bf16.xpose.msra.mxu0 %v1075
        %1085 = vmatmul.bf16.gmra.mxu0 %v1072
        %v1086 = vpop.f32.mrf.mxu0
        %v1087 = vadd.f32 0.0, %v1086
        %v1088 = vpop.f32.mrf.mxu0
        %1089 = vdwg.mxu0
        %v1090 = vmul.f32 %v1087, 0.25
        %v1091 = vadd.f32 %v1090, %v867
        %v1092 = vsel %vm1028, %v1091, -inf
        %1093 = vmax.xlane.f32.xlu0 %v1092
        %v1094 = vpop.xlane.xlu0 %1093
        %v1095 = vsub.f32 %v1091, %v1094
        %v1096 = vmul.f32 %v1095, 1.442695
        %v1097 = vpow.pop %v1096
        %v1098 = vsel %vm1028, %v1097, 0.0
        %1099 = vadd.xlane.f32.xlu0 %v1098
        %v1100 = vpop.xlane.xlu0 %1099
        %v1101 = vrcp.pop %v1100
        %v1102 = vmul.f32 %v1097, %v1101
        %v1103 = vpack.c.bf16 %v1102, %v1102
        %v1105 = vunpack.c.l.b16 %v1005
        %v1106 = vpack.c.b16 %v1105, %v1105
        %1107 = vrot.lane.b32.xlu0 %v1106, 112
        %v1108 = vpop.permute.xlu0 %1107
        %v1110 = vsel %vm1028, %v1103, 0
        %v1113 = vsel %vm1044, %v1108, 0
        %1115 = vmatpush.bf16.msra.mxu0 0
        %1116 = vmatpush.bf16.msra.mxu0 0
        %1117 = vmatpush.bf16.msra.mxu0 0
        %1118 = vmatpush.bf16.msra.mxu0 0
        %1119 = vmatpush.bf16.msra.mxu0 0
        %1120 = vmatpush.bf16.msra.mxu0 0
        %1121 = vmatpush.bf16.msra.mxu0 0
        %1122 = vmatpush.bf16.msra.mxu0 %v1113
        %1123 = vmatmul.bf16.gmra.mxu0 %v1110
        %v1124 = vpop.f32.mrf.mxu0
        %v1125 = vadd.f32 0.0, %v1124
        %v1126 = vpop.f32.mrf.mxu0
        %1127 = vdwg.mxu0
        %1129 = vrot.lane.b32.xlu0 %v1125, 16
        %v1130 = vpop.permute.xlu0 %1129
        %v1132 = vsel %vm1006, %v1058, %v1130
        %v1133 = vpack.c.bf16 %v1132, %v1132
        %v1134 = vld [vmem:[#allocation9] sm:$0xf]
        %v1135 = vld [vmem:[#allocation9 + $0x4] sm:$0xf]
        %v1136 = vld [vmem:[#allocation9 + $0x8] sm:$0xf]
        %v1137 = vld [vmem:[#allocation9 + $0xc] sm:$0xf]
        %v1142 = vunpack.c.l.b16 %v1134
        %v1143 = vunpack.c.l.b16 %v1135
        %v1144 = vunpack.c.l.b16 %v1136
        %v1145 = vunpack.c.l.b16 %v1137
        %v1146 = vpack.c.b16 %v1143, %v1142
        %v1147 = vpack.c.b16 %v1145, %v1144
        %v1151 = vsel %vm870, %v1133, 0
        %1153 = vmatpush.bf16.msra.mxu0 0
        %1154 = vmatpush.bf16.msra.mxu0 0
        %1155 = vmatpush.bf16.msra.mxu0 0
        %1156 = vmatpush.bf16.msra.mxu0 0
        %1157 = vmatpush.bf16.msra.mxu0 0
        %1158 = vmatpush.bf16.msra.mxu0 0
        %1159 = vmatpush.bf16.msra.mxu0 %v1147
        %1160 = vmatpush.bf16.msra.mxu0 %v1146
        %1161 = vmatmul.bf16.gmra.mxu0 %v1151
        %v1162 = vpop.f32.mrf.mxu0
        %v1163 = vadd.f32 0.0, %v1162
        %v1164 = vpop.f32.mrf.mxu0
        %1165 = vdwg.mxu0
        %v1166 = vadd.f32 %v907, %v1163
        %v1167 = vld [vmem:[%s8] sm:$0x1]
        %v1168 = vld [vmem:[#allocation10] sm:$0x1]
        %v1169 = vsel %vm870, %v1166, 0.0
        %1170 = vadd.xlane.f32.xlu0 %v1169
        %v1171 = vpop.xlane.xlu0 %1170
        %v1172 = vmul.f32 %v1171, %v880
        %v1173 = vsub.f32 %v1166, %v1172
        %v1174 = vmul.f32 %v1173, %v1173
        %v1175 = vsel %vm870, %v1174, 0.0
        %1176 = vadd.xlane.f32.xlu0 %v1175
        %v1177 = vpop.xlane.xlu0 %1176
        %v1178 = vmul.f32 %v1177, %v880
        %v1179 = vadd.f32 %v1178, 1e-08
        %v1180 = vrsqrt.pop %v1179
        %v1181 = vmul.f32 %v1180, %v1179
        %v1182 = vmul.f32 %v1181, %v1180
        %v1183 = vmul.f32 0.5, %v1182
        %v1184 = vsub.f32 1.5, %v1183
        %v1185 = vmul.f32 %v1180, %v1184
        %vm1186 = vweird.f32 %v1179
        %vm1187 = vweird.f32 %v1180
        %vm1188 = vmor %vm1186, %vm1187
        %v1189 = vsel %vm1188, %v1180, %v1185
        %v1190 = vmul.f32 %v1173, %v1189
        %v1192 = vperm.slane %v1167, 0
        %v1194 = vmul.f32 %v1190, %v1192
        %v1196 = vperm.slane %v1168, 0
        %v1198 = vadd.f32 %v1194, %v1196
        %v1199 = vpack.c.bf16 %v1198, %v1198
        %v1200 = vld [vmem:[#allocation12] sm:$0xf]
        %v1201 = vld [vmem:[#allocation12 + $0x4] sm:$0xf]
        %v1202 = vld [vmem:[#allocation12 + $0x8] sm:$0xf]
        %v1203 = vld [vmem:[#allocation12 + $0xc] sm:$0xf]
        %v1204 = vld [vmem:[#allocation13] sm:$0x1]
        %v1206 = vperm.slane %v1204, 0
        %v1212 = vunpack.c.l.b16 %v1200
        %v1213 = vunpack.c.l.b16 %v1201
        %v1214 = vunpack.c.l.b16 %v1202
        %v1215 = vunpack.c.l.b16 %v1203
        %v1216 = vpack.c.b16 %v1213, %v1212
        %v1217 = vpack.c.b16 %v1215, %v1214
        %v1221 = vsel %vm870, %v1199, 0
        %1223 = vmatpush.bf16.msra.mxu0 0
        %1224 = vmatpush.bf16.msra.mxu0 0
        %1225 = vmatpush.bf16.msra.mxu0 0
        %1226 = vmatpush.bf16.msra.mxu0 0
        %1227 = vmatpush.bf16.msra.mxu0 0
        %1228 = vmatpush.bf16.msra.mxu0 0
        %1229 = vmatpush.bf16.msra.mxu0 %v1217
        %1230 = vmatpush.bf16.msra.mxu0 %v1216
        %1231 = vmatmul.bf16.gmra.mxu0 %v1221
        %v1232 = vpop.f32.mrf.mxu0
        %v1233 = vadd.f32 %v1206, %v1232
        %v1234 = vpop.f32.mrf.mxu0
        %1235 = vdwg.mxu0
        %v1236 = vmax.f32 %v1233, 0.0
        %v1237 = vpack.c.bf16 %v1236, %v1236
        %v1238 = vld [vmem:[#allocation15] sm:$0xf]
        %v1239 = vld [vmem:[#allocation15 + $0x4] sm:$0xf]
        %v1240 = vld [vmem:[#allocation15 + $0x8] sm:$0xf]
        %v1241 = vld [vmem:[#allocation15 + $0xc] sm:$0xf]
        %v1242 = vld [vmem:[#allocation16] sm:$0x1]
        %v1244 = vperm.slane %v1242, 0
        %v1250 = vunpack.c.l.b16 %v1238
        %v1251 = vunpack.c.l.b16 %v1239
        %v1252 = vunpack.c.l.b16 %v1240
        %v1253 = vunpack.c.l.b16 %v1241
        %v1254 = vpack.c.b16 %v1251, %v1250
        %v1255 = vpack.c.b16 %v1253, %v1252
        %v1259 = vsel %vm870, %v1237, 0
        %1261 = vmatpush.bf16.msra.mxu0 0
        %1262 = vmatpush.bf16.msra.mxu0 0
        %1263 = vmatpush.bf16.msra.mxu0 0
        %1264 = vmatpush.bf16.msra.mxu0 0
        %1265 = vmatpush.bf16.msra.mxu0 0
        %1266 = vmatpush.bf16.msra.mxu0 0
        %1267 = vmatpush.bf16.msra.mxu0 %v1255
        %1268 = vmatpush.bf16.msra.mxu0 %v1254
        %1269 = vmatmul.bf16.gmra.mxu0 %v1259
        %v1270 = vpop.f32.mrf.mxu0
        %v1271 = vadd.f32 %v1244, %v1270
        %v1272 = vpop.f32.mrf.mxu0
        %1273 = vdwg.mxu0
        %v1274 = vadd.f32 %v1271, %v1198
        %1276 = vset.pattern.permute.xlu0 0
        %1277 = vperm.xlu0 %1276, %v861
        %v1278 = vpop.permute.xlu0 %1277
        %v1280 = vmul.f32 %v1274, %v1278
        %s1281 = scalar_lea.vmem %s2, 1
        %v1282 = vld [vmem:[%s1281] sm:$0x1]
        %s1283 = scalar_lea.vmem %s3, 1
        %v1284 = vld [vmem:[%s1283] sm:$0x1]
        %v1285 = vsel %vm870, %v1280, 0.0
        %1286 = vadd.xlane.f32.xlu0 %v1285
        %v1287 = vpop.xlane.xlu0 %1286
        %v1288 = vmul.f32 %v1287, %v880
        %v1289 = vsub.f32 %v1280, %v1288
        %v1290 = vmul.f32 %v1289, %v1289
        %v1291 = vsel %vm870, %v1290, 0.0
        %1292 = vadd.xlane.f32.xlu0 %v1291
        %v1293 = vpop.xlane.xlu0 %1292
        %v1294 = vmul.f32 %v1293, %v880
        %v1295 = vadd.f32 %v1294, 1e-08
        %v1296 = vrsqrt.pop %v1295
        %v1297 = vmul.f32 %v1296, %v1295
        %v1298 = vmul.f32 %v1297, %v1296
        %v1299 = vmul.f32 0.5, %v1298
        %v1300 = vsub.f32 1.5, %v1299
        %v1301 = vmul.f32 %v1296, %v1300
        %vm1302 = vweird.f32 %v1295
        %vm1303 = vweird.f32 %v1296
        %vm1304 = vmor %vm1302, %vm1303
        %v1305 = vsel %vm1304, %v1296, %v1301
        %v1306 = vmul.f32 %v1289, %v1305
        %v1308 = vperm.slane %v1282, 0
        %v1310 = vmul.f32 %v1306, %v1308
        %v1312 = vperm.slane %v1284, 0
        %v1314 = vadd.f32 %v1310, %v1312
        %v1315 = vpack.c.bf16 %v1280, %v1280
        %v1316 = vpack.c.bf16 %v1314, %v1314
        %s1317 = scalar_lea.vmem [#allocation4], 16
        %v1318 = vld [vmem:[%s1317] sm:$0xf]
        %v1319 = vld [vmem:[%s1317 + $0x4] sm:$0xf]
        %v1320 = vld [vmem:[%s1317 + $0x8] sm:$0xf]
        %v1321 = vld [vmem:[%s1317 + $0xc] sm:$0xf]
        %v1326 = vunpack.c.l.b16 %v1318
        %v1327 = vunpack.c.l.b16 %v1319
        %v1328 = vunpack.c.l.b16 %v1320
        %v1329 = vunpack.c.l.b16 %v1321
        %v1330 = vpack.c.b16 %v1327, %v1326
        %v1331 = vpack.c.b16 %v1329, %v1328
        %v1335 = vsel %vm870, %v1316, 0
        %1337 = vmatpush.bf16.msra.mxu0 0
        %1338 = vmatpush.bf16.msra.mxu0 0
        %1339 = vmatpush.bf16.msra.mxu0 0
        %1340 = vmatpush.bf16.msra.mxu0 0
        %1341 = vmatpush.bf16.msra.mxu0 0
        %1342 = vmatpush.bf16.msra.mxu0 0
        %1343 = vmatpush.bf16.msra.mxu0 %v1331
        %1344 = vmatpush.bf16.msra.mxu0 %v1330
        %1345 = vmatmul.bf16.gmra.mxu0 %v1335
        %v1346 = vpop.f32.mrf.mxu0
        %v1347 = vadd.f32 0.0, %v1346
        %v1348 = vpop.f32.mrf.mxu0
        %1349 = vdwg.mxu0
        %s1350 = scalar_lea.vmem [#allocation6], 16
        %v1351 = vld [vmem:[%s1350] sm:$0xf]
        %v1352 = vld [vmem:[%s1350 + $0x4] sm:$0xf]
        %v1353 = vld [vmem:[%s1350 + $0x8] sm:$0xf]
        %v1354 = vld [vmem:[%s1350 + $0xc] sm:$0xf]
        %v1359 = vunpack.c.l.b16 %v1351
        %v1360 = vunpack.c.l.b16 %v1352
        %v1361 = vunpack.c.l.b16 %v1353
        %v1362 = vunpack.c.l.b16 %v1354
        %v1363 = vpack.c.b16 %v1360, %v1359
        %v1364 = vpack.c.b16 %v1362, %v1361
        %v1368 = vsel %vm870, %v1315, 0
        %1370 = vmatpush.bf16.msra.mxu0 0
        %1371 = vmatpush.bf16.msra.mxu0 0
        %1372 = vmatpush.bf16.msra.mxu0 0
        %1373 = vmatpush.bf16.msra.mxu0 0
        %1374 = vmatpush.bf16.msra.mxu0 0
        %1375 = vmatpush.bf16.msra.mxu0 0
        %1376 = vmatpush.bf16.msra.mxu0 %v1364
        %1377 = vmatpush.bf16.msra.mxu0 %v1363
        %1378 = vmatmul.bf16.gmra.mxu0 %v1368
        %v1379 = vpop.f32.mrf.mxu0
        %v1380 = vadd.f32 0.0, %v1379
        %v1381 = vpop.f32.mrf.mxu0
        %1382 = vdwg.mxu0
        %s1383 = scalar_lea.vmem [#allocation7], 16
        %v1384 = vld [vmem:[%s1383] sm:$0xf]
        %v1385 = vld [vmem:[%s1383 + $0x4] sm:$0xf]
        %v1386 = vld [vmem:[%s1383 + $0x8] sm:$0xf]
        %v1387 = vld [vmem:[%s1383 + $0xc] sm:$0xf]
        %v1392 = vunpack.c.l.b16 %v1384
        %v1393 = vunpack.c.l.b16 %v1385
        %v1394 = vunpack.c.l.b16 %v1386
        %v1395 = vunpack.c.l.b16 %v1387
        %v1396 = vpack.c.b16 %v1393, %v1392
        %v1397 = vpack.c.b16 %v1395, %v1394
        %1400 = vmatpush.bf16.msra.mxu0 0
        %1401 = vmatpush.bf16.msra.mxu0 0
        %1402 = vmatpush.bf16.msra.mxu0 0
        %1403 = vmatpush.bf16.msra.mxu0 0
        %1404 = vmatpush.bf16.msra.mxu0 0
        %1405 = vmatpush.bf16.msra.mxu0 0
        %1406 = vmatpush.bf16.msra.mxu0 %v1397
        %1407 = vmatpush.bf16.msra.mxu0 %v1396
        %1408 = vmatmul.bf16.gmra.mxu0 %v1368
        %v1409 = vpop.f32.mrf.mxu0
        %v1410 = vadd.f32 0.0, %v1409
        %v1411 = vpop.f32.mrf.mxu0
        %1412 = vdwg.mxu0
        %v1413 = vpack.c.bf16 %v1347, %v1347
        %v1414 = vpack.c.bf16 %v1380, %v1380
        %v1415 = vpack.c.bf16 %v1410, %v1410
        %v1417 = vsel %vm1006, %v1413, 0
        %v1420 = vsel %vm1006, %v1414, 0
        %1422 = vmatpush.bf16.xpose.msra.mxu0 0
        %1423 = vmatpush.bf16.xpose.msra.mxu0 0
        %1424 = vmatpush.bf16.xpose.msra.mxu0 0
        %1425 = vmatpush.bf16.xpose.msra.mxu0 0
        %1426 = vmatpush.bf16.xpose.msra.mxu0 0
        %1427 = vmatpush.bf16.xpose.msra.mxu0 0
        %1428 = vmatpush.bf16.xpose.msra.mxu0 0
        %1429 = vmatpush.bf16.xpose.msra.mxu0 %v1420
        %1430 = vmatmul.bf16.gmra.mxu0 %v1417
        %v1431 = vpop.f32.mrf.mxu0
        %v1432 = vadd.f32 0.0, %v1431
        %v1433 = vpop.f32.mrf.mxu0
        %1434 = vdwg.mxu0
        %v1435 = vmul.f32 %v1432, 0.25
        %v1436 = vadd.f32 %v1435, %v867
        %v1437 = vsel %vm1028, %v1436, -inf
        %1438 = vmax.xlane.f32.xlu0 %v1437
        %v1439 = vpop.xlane.xlu0 %1438
        %v1440 = vsub.f32 %v1436, %v1439
        %v1441 = vmul.f32 %v1440, 1.442695
        %v1442 = vpow.pop %v1441
        %v1443 = vsel %vm1028, %v1442, 0.0
        %1444 = vadd.xlane.f32.xlu0 %v1443
        %v1445 = vpop.xlane.xlu0 %1444
        %v1446 = vrcp.pop %v1445
        %v1447 = vmul.f32 %v1442, %v1446
        %v1448 = vpack.c.bf16 %v1447, %v1447
        %v1450 = vsel %vm1028, %v1448, 0
        %v1453 = vsel %vm1044, %v1415, 0
        %1455 = vmatpush.bf16.msra.mxu0 0
        %1456 = vmatpush.bf16.msra.mxu0 0
        %1457 = vmatpush.bf16.msra.mxu0 0
        %1458 = vmatpush.bf16.msra.mxu0 0
        %1459 = vmatpush.bf16.msra.mxu0 0
        %1460 = vmatpush.bf16.msra.mxu0 0
        %1461 = vmatpush.bf16.msra.mxu0 0
        %1462 = vmatpush.bf16.msra.mxu0 %v1453
        %1463 = vmatmul.bf16.gmra.mxu0 %v1450
        %v1464 = vpop.f32.mrf.mxu0
        %v1465 = vadd.f32 0.0, %v1464
        %v1466 = vpop.f32.mrf.mxu0
        %1467 = vdwg.mxu0
        %v1469 = vunpack.c.l.b16 %v1413
        %v1470 = vpack.c.b16 %v1469, %v1469
        %1471 = vrot.lane.b32.xlu0 %v1470, 112
        %v1472 = vpop.permute.xlu0 %1471
        %v1474 = vunpack.c.l.b16 %v1414
        %v1475 = vpack.c.b16 %v1474, %v1474
        %1476 = vrot.lane.b32.xlu0 %v1475, 112
        %v1477 = vpop.permute.xlu0 %1476
        %v1479 = vsel %vm1006, %v1472, 0
        %v1482 = vsel %vm1006, %v1477, 0
        %1484 = vmatpush.bf16.xpose.msra.mxu0 0
        %1485 = vmatpush.bf16.xpose.msra.mxu0 0
        %1486 = vmatpush.bf16.xpose.msra.mxu0 0
        %1487 = vmatpush.bf16.xpose.msra.mxu0 0
        %1488 = vmatpush.bf16.xpose.msra.mxu0 0
        %1489 = vmatpush.bf16.xpose.msra.mxu0 0
        %1490 = vmatpush.bf16.xpose.msra.mxu0 0
        %1491 = vmatpush.bf16.xpose.msra.mxu0 %v1482
        %1492 = vmatmul.bf16.gmra.mxu0 %v1479
        %v1493 = vpop.f32.mrf.mxu0
        %v1494 = vadd.f32 0.0, %v1493
        %v1495 = vpop.f32.mrf.mxu0
        %1496 = vdwg.mxu0
        %v1497 = vmul.f32 %v1494, 0.25
        %v1498 = vadd.f32 %v1497, %v867
        %v1499 = vsel %vm1028, %v1498, -inf
        %1500 = vmax.xlane.f32.xlu0 %v1499
        %v1501 = vpop.xlane.xlu0 %1500
        %v1502 = vsub.f32 %v1498, %v1501
        %v1503 = vmul.f32 %v1502, 1.442695
        %v1504 = vpow.pop %v1503
        %v1505 = vsel %vm1028, %v1504, 0.0
        %1506 = vadd.xlane.f32.xlu0 %v1505
        %v1507 = vpop.xlane.xlu0 %1506
        %v1508 = vrcp.pop %v1507
        %v1509 = vmul.f32 %v1504, %v1508
        %v1510 = vpack.c.bf16 %v1509, %v1509
        %v1512 = vunpack.c.l.b16 %v1415
        %v1513 = vpack.c.b16 %v1512, %v1512
        %1514 = vrot.lane.b32.xlu0 %v1513, 112
        %v1515 = vpop.permute.xlu0 %1514
        %v1517 = vsel %vm1028, %v1510, 0
        %v1520 = vsel %vm1044, %v1515, 0
        %1522 = vmatpush.bf16.msra.mxu0 0
        %1523 = vmatpush.bf16.msra.mxu0 0
        %1524 = vmatpush.bf16.msra.mxu0 0
        %1525 = vmatpush.bf16.msra.mxu0 0
        %1526 = vmatpush.bf16.msra.mxu0 0
        %1527 = vmatpush.bf16.msra.mxu0 0
        %1528 = vmatpush.bf16.msra.mxu0 0
        %1529 = vmatpush.bf16.msra.mxu0 %v1520
        %1530 = vmatmul.bf16.gmra.mxu0 %v1517
        %v1531 = vpop.f32.mrf.mxu0
        %v1532 = vadd.f32 0.0, %v1531
        %v1533 = vpop.f32.mrf.mxu0
        %1534 = vdwg.mxu0
        %1536 = vrot.lane.b32.xlu0 %v1532, 16
        %v1537 = vpop.permute.xlu0 %1536
        %v1539 = vsel %vm1006, %v1465, %v1537
        %v1540 = vpack.c.bf16 %v1539, %v1539
        %s1541 = scalar_lea.vmem [#allocation9], 16
        %v1542 = vld [vmem:[%s1541] sm:$0xf]
        %v1543 = vld [vmem:[%s1541 + $0x4] sm:$0xf]
        %v1544 = vld [vmem:[%s1541 + $0x8] sm:$0xf]
        %v1545 = vld [vmem:[%s1541 + $0xc] sm:$0xf]
        %v1550 = vunpack.c.l.b16 %v1542
        %v1551 = vunpack.c.l.b16 %v1543
        %v1552 = vunpack.c.l.b16 %v1544
        %v1553 = vunpack.c.l.b16 %v1545
        %v1554 = vpack.c.b16 %v1551, %v1550
        %v1555 = vpack.c.b16 %v1553, %v1552
        %v1559 = vsel %vm870, %v1540, 0
        %1561 = vmatpush.bf16.msra.mxu0 0
        %1562 = vmatpush.bf16.msra.mxu0 0
        %1563 = vmatpush.bf16.msra.mxu0 0
        %1564 = vmatpush.bf16.msra.mxu0 0
        %1565 = vmatpush.bf16.msra.mxu0 0
        %1566 = vmatpush.bf16.msra.mxu0 0
        %1567 = vmatpush.bf16.msra.mxu0 %v1555
        %1568 = vmatpush.bf16.msra.mxu0 %v1554
        %1569 = vmatmul.bf16.gmra.mxu0 %v1559
        %v1570 = vpop.f32.mrf.mxu0
        %v1571 = vadd.f32 0.0, %v1570
        %v1572 = vpop.f32.mrf.mxu0
        %1573 = vdwg.mxu0
        %v1574 = vadd.f32 %v1314, %v1571
        %s1575 = scalar_lea.vmem %s8, 1
        %v1576 = vld [vmem:[%s1575] sm:$0x1]
        %s1577 = scalar_lea.vmem [#allocation10], 1
        %v1578 = vld [vmem:[%s1577] sm:$0x1]
        %v1579 = vsel %vm870, %v1574, 0.0
        %1580 = vadd.xlane.f32.xlu0 %v1579
        %v1581 = vpop.xlane.xlu0 %1580
        %v1582 = vmul.f32 %v1581, %v880
        %v1583 = vsub.f32 %v1574, %v1582
        %v1584 = vmul.f32 %v1583, %v1583
        %v1585 = vsel %vm870, %v1584, 0.0
        %1586 = vadd.xlane.f32.xlu0 %v1585
        %v1587 = vpop.xlane.xlu0 %1586
        %v1588 = vmul.f32 %v1587, %v880
        %v1589 = vadd.f32 %v1588, 1e-08
        %v1590 = vrsqrt.pop %v1589
        %v1591 = vmul.f32 %v1590, %v1589
        %v1592 = vmul.f32 %v1591, %v1590
        %v1593 = vmul.f32 0.5, %v1592
        %v1594 = vsub.f32 1.5, %v1593
        %v1595 = vmul.f32 %v1590, %v1594
        %vm1596 = vweird.f32 %v1589
        %vm1597 = vweird.f32 %v1590
        %vm1598 = vmor %vm1596, %vm1597
        %v1599 = vsel %vm1598, %v1590, %v1595
        %v1600 = vmul.f32 %v1583, %v1599
        %v1602 = vperm.slane %v1576, 0
        %v1604 = vmul.f32 %v1600, %v1602
        %v1606 = vperm.slane %v1578, 0
        %v1608 = vadd.f32 %v1604, %v1606
        %v1609 = vpack.c.bf16 %v1608, %v1608
        %s1610 = scalar_lea.vmem [#allocation12], 16
        %v1611 = vld [vmem:[%s1610] sm:$0xf]
        %v1612 = vld [vmem:[%s1610 + $0x4] sm:$0xf]
        %v1613 = vld [vmem:[%s1610 + $0x8] sm:$0xf]
        %v1614 = vld [vmem:[%s1610 + $0xc] sm:$0xf]
        %s1615 = scalar_lea.vmem [#allocation13], 1
        %v1616 = vld [vmem:[%s1615] sm:$0x1]
        %v1618 = vperm.slane %v1616, 0
        %v1624 = vunpack.c.l.b16 %v1611
        %v1625 = vunpack.c.l.b16 %v1612
        %v1626 = vunpack.c.l.b16 %v1613
        %v1627 = vunpack.c.l.b16 %v1614
        %v1628 = vpack.c.b16 %v1625, %v1624
        %v1629 = vpack.c.b16 %v1627, %v1626
        %v1633 = vsel %vm870, %v1609, 0
        %1635 = vmatpush.bf16.msra.mxu0 0
        %1636 = vmatpush.bf16.msra.mxu0 0
        %1637 = vmatpush.bf16.msra.mxu0 0
        %1638 = vmatpush.bf16.msra.mxu0 0
        %1639 = vmatpush.bf16.msra.mxu0 0
        %1640 = vmatpush.bf16.msra.mxu0 0
        %1641 = vmatpush.bf16.msra.mxu0 %v1629
        %1642 = vmatpush.bf16.msra.mxu0 %v1628
        %1643 = vmatmul.bf16.gmra.mxu0 %v1633
        %v1644 = vpop.f32.mrf.mxu0
        %v1645 = vadd.f32 %v1618, %v1644
        %v1646 = vpop.f32.mrf.mxu0
        %1647 = vdwg.mxu0
        %v1648 = vmax.f32 %v1645, 0.0
        %v1649 = vpack.c.bf16 %v1648, %v1648
        %s1650 = scalar_lea.vmem [#allocation15], 16
        %v1651 = vld [vmem:[%s1650] sm:$0xf]
        %v1652 = vld [vmem:[%s1650 + $0x4] sm:$0xf]
        %v1653 = vld [vmem:[%s1650 + $0x8] sm:$0xf]
        %v1654 = vld [vmem:[%s1650 + $0xc] sm:$0xf]
        %s1655 = scalar_lea.vmem [#allocation16], 1
        %v1656 = vld [vmem:[%s1655] sm:$0x1]
        %v1658 = vperm.slane %v1656, 0
        %v1664 = vunpack.c.l.b16 %v1651
        %v1665 = vunpack.c.l.b16 %v1652
        %v1666 = vunpack.c.l.b16 %v1653
        %v1667 = vunpack.c.l.b16 %v1654
        %v1668 = vpack.c.b16 %v1665, %v1664
        %v1669 = vpack.c.b16 %v1667, %v1666
        %v1673 = vsel %vm870, %v1649, 0
        %1675 = vmatpush.bf16.msra.mxu0 0
        %1676 = vmatpush.bf16.msra.mxu0 0
        %1677 = vmatpush.bf16.msra.mxu0 0
        %1678 = vmatpush.bf16.msra.mxu0 0
        %1679 = vmatpush.bf16.msra.mxu0 0
        %1680 = vmatpush.bf16.msra.mxu0 0
        %1681 = vmatpush.bf16.msra.mxu0 %v1669
        %1682 = vmatpush.bf16.msra.mxu0 %v1668
        %1683 = vmatmul.bf16.gmra.mxu0 %v1673
        %v1684 = vpop.f32.mrf.mxu0
        %v1685 = vadd.f32 %v1658, %v1684
        %v1686 = vpop.f32.mrf.mxu0
        %1687 = vdwg.mxu0
        %v1688 = vadd.f32 %v1685, %v1608
        %v1689 = vmul.f32 %v1688, %v1278
        %v1690 = vld [vmem:[#allocation18] sm:$0x1]
        %v1691 = vld [vmem:[#allocation19] sm:$0x1]
        %v1692 = vsel %vm870, %v1689, 0.0
        %1693 = vadd.xlane.f32.xlu0 %v1692
        %v1694 = vpop.xlane.xlu0 %1693
        %v1695 = vmul.f32 %v1694, %v880
        %v1696 = vsub.f32 %v1689, %v1695
        %v1697 = vmul.f32 %v1696, %v1696
        %v1698 = vsel %vm870, %v1697, 0.0
        %1699 = vadd.xlane.f32.xlu0 %v1698
        %v1700 = vpop.xlane.xlu0 %1699
        %v1701 = vmul.f32 %v1700, %v880
        %v1702 = vadd.f32 %v1701, 1e-08
        %v1703 = vrsqrt.pop %v1702
        %v1704 = vmul.f32 %v1703, %v1702
        %v1705 = vmul.f32 %v1704, %v1703
        %v1706 = vmul.f32 0.5, %v1705
        %v1707 = vsub.f32 1.5, %v1706
        %v1708 = vmul.f32 %v1703, %v1707
        %vm1709 = vweird.f32 %v1702
        %vm1710 = vweird.f32 %v1703
        %vm1711 = vmor %vm1709, %vm1710
        %v1712 = vsel %vm1711, %v1703, %v1708
        %v1713 = vmul.f32 %v1696, %v1712
        %v1715 = vperm.slane %v1690, 0
        %v1717 = vmul.f32 %v1713, %v1715
        %v1719 = vperm.slane %v1691, 0
        %v1721 = vadd.f32 %v1717, %v1719
        %v1722 = vld [vmem:[%s792] sm:$0xf]
        %v1723 = vunpack.c.l.bf16 %v1722
        %s1724 = scalar_lea.vmem %s792, 4 [#allocation21]
        %v1725 = vld [vmem:[%s1724] sm:$0xf]
        %v1726 = vunpack.c.l.bf16 %v1725
        %s1727 = scalar_lea.vmem %s792, 8 [#allocation21]
        %v1728 = vld [vmem:[%s1727] sm:$0xf]
        %v1729 = vunpack.c.l.bf16 %v1728
        %v1730 = vld [vmem:[%s16] sm:$0x1]
        %v1731 = vperm.slane %v1730, 0
        %v1732 = vmul.f32 %v1721, %v1731
        %v1733 = vxor.u32 %v1732, 2147483648
        %v1734 = vmul.f32 %v1733, 1.442695
        %v1735 = vpow.pop %v1734
        %v1736 = vadd.f32 %v1735, 1.0
        %v1737 = vrcp.pop %v1736
        %v1738 = vmul.f32 %v1736, %v1737
        %v1739 = vsub.f32 1.0, %v1738
        %v1740 = vmul.f32 %v1737, %v1739
        %v1741 = vadd.f32 %v1737, %v1740
        %vm1742 = vweird.f32 %v1736
        %vm1743 = vweird.f32 %v1737
        %vm1744 = vmor %vm1742, %vm1743
        %v1745 = vsel %vm1744, %v1737, %v1741
        %v1746 = vand.u32 2147483647, %v1736
        %vm1747 = vcmp.eq.f32.partialorder %v1746, 8.507059e+37
        %v1748 = vand.u32 %v1736, 2147483648
        %v1749 = vor.u32 1.1754944e-38, %v1748
        %v1750 = vsel %vm1747, %v1749, %v1745
        %v1751 = vmul.f32 1.0, %v1750
        %v1752 = vmul.f32 %v1751, %v1721
        %v1753 = vadd.f32 %v1721, %v1752
        %v1754 = vmul.f32 %v1753, %v1723
        %v1755 = vsel %vm870, %v1754, 0.0
        %1756 = vadd.xlane.f32.xlu0 %v1755
        %v1757 = vpop.xlane.xlu0 %1756
        %v1758 = vmul.f32 %v1753, %v1726
        %v1759 = vsel %vm870, %v1758, 0.0
        %1760 = vadd.xlane.f32.xlu0 %v1759
        %v1761 = vpop.xlane.xlu0 %1760
        %v1762 = vmul.f32 %v1753, %v1729
        %v1763 = vsel %vm870, %v1762, 0.0
        %1764 = vadd.xlane.f32.xlu0 %v1763
        %v1765 = vpop.xlane.xlu0 %1764
        %v1766 = vadd.f32 %v1757, 0.0
        %v1767 = vadd.f32 %v1761, 0.0
        %v1768 = vsub.f32 %v1757, %v1765
        %v1769 = vld [vmem:[%s16 + $0x1] sm:$0x1]
        %v1770 = vperm.slane %v1769, 0
        %v1771 = vmul.f32 %v1721, %v1770
        %v1772 = vxor.u32 %v1771, 2147483648
        %v1773 = vmul.f32 %v1772, 1.442695
        %v1774 = vpow.pop %v1773
        %v1775 = vadd.f32 %v1774, 1.0
        %v1776 = vrcp.pop %v1775
        %v1777 = vmul.f32 %v1775, %v1776
        %v1778 = vsub.f32 1.0, %v1777
        %v1779 = vmul.f32 %v1776, %v1778
        %v1780 = vadd.f32 %v1776, %v1779
        %vm1781 = vweird.f32 %v1775
        %vm1782 = vweird.f32 %v1776
        %vm1783 = vmor %vm1781, %vm1782
        %v1784 = vsel %vm1783, %v1776, %v1780
        %v1785 = vand.u32 2147483647, %v1775
        %vm1786 = vcmp.eq.f32.partialorder %v1785, 8.507059e+37
        %v1787 = vand.u32 %v1775, 2147483648
        %v1788 = vor.u32 1.1754944e-38, %v1787
        %v1789 = vsel %vm1786, %v1788, %v1784
        %v1790 = vmul.f32 1.0, %v1789
        %v1791 = vmul.f32 %v1790, %v1721
        %v1792 = vadd.f32 %v1721, %v1791
        %v1793 = vmul.f32 %v1792, %v1723
        %v1794 = vsel %vm870, %v1793, 0.0
        %1795 = vadd.xlane.f32.xlu0 %v1794
        %v1796 = vpop.xlane.xlu0 %1795
        %v1797 = vmul.f32 %v1792, %v1726
        %v1798 = vsel %vm870, %v1797, 0.0
        %1799 = vadd.xlane.f32.xlu0 %v1798
        %v1800 = vpop.xlane.xlu0 %1799
        %v1801 = vmul.f32 %v1792, %v1729
        %v1802 = vsel %vm870, %v1801, 0.0
        %1803 = vadd.xlane.f32.xlu0 %v1802
        %v1804 = vpop.xlane.xlu0 %1803
        %v1805 = vadd.f32 %v1766, %v1796
        %v1806 = vadd.f32 %v1767, %v1800
        %v1807 = vsub.f32 %v1796, %v1804
        %v1808 = vmax.f32 %v1768, %v1807
        %v1809 = vld [vmem:[%s16 + $0x2] sm:$0x1]
        %v1810 = vperm.slane %v1809, 0
        %v1811 = vmul.f32 %v1721, %v1810
        %v1812 = vxor.u32 %v1811, 2147483648
        %v1813 = vmul.f32 %v1812, 1.442695
        %v1814 = vpow.pop %v1813
        %v1815 = vadd.f32 %v1814, 1.0
        %v1816 = vrcp.pop %v1815
        %v1817 = vmul.f32 %v1815, %v1816
        %v1818 = vsub.f32 1.0, %v1817
        %v1819 = vmul.f32 %v1816, %v1818
        %v1820 = vadd.f32 %v1816, %v1819
        %vm1821 = vweird.f32 %v1815
        %vm1822 = vweird.f32 %v1816
        %vm1823 = vmor %vm1821, %vm1822
        %v1824 = vsel %vm1823, %v1816, %v1820
        %v1825 = vand.u32 2147483647, %v1815
        %vm1826 = vcmp.eq.f32.partialorder %v1825, 8.507059e+37
        %v1827 = vand.u32 %v1815, 2147483648
        %v1828 = vor.u32 1.1754944e-38, %v1827
        %v1829 = vsel %vm1826, %v1828, %v1824
        %v1830 = vmul.f32 1.0, %v1829
        %v1831 = vmul.f32 %v1830, %v1721
        %v1832 = vadd.f32 %v1721, %v1831
        %v1833 = vmul.f32 %v1832, %v1723
        %v1834 = vsel %vm870, %v1833, 0.0
        %1835 = vadd.xlane.f32.xlu0 %v1834
        %v1836 = vpop.xlane.xlu0 %1835
        %v1837 = vmul.f32 %v1832, %v1726
        %v1838 = vsel %vm870, %v1837, 0.0
        %1839 = vadd.xlane.f32.xlu0 %v1838
        %v1840 = vpop.xlane.xlu0 %1839
        %v1841 = vmul.f32 %v1832, %v1729
        %v1842 = vsel %vm870, %v1841, 0.0
        %1843 = vadd.xlane.f32.xlu0 %v1842
        %v1844 = vpop.xlane.xlu0 %1843
        %v1845 = vadd.f32 %v1805, %v1836
        %v1846 = vadd.f32 %v1806, %v1840
        %v1847 = vsub.f32 %v1836, %v1844
        %v1848 = vmax.f32 %v1808, %v1847
        %v1849 = vld [vmem:[%s16 + $0x3] sm:$0x1]
        %v1850 = vperm.slane %v1849, 0
        %v1851 = vmul.f32 %v1721, %v1850
        %v1852 = vxor.u32 %v1851, 2147483648
        %v1853 = vmul.f32 %v1852, 1.442695
        %v1854 = vpow.pop %v1853
        %v1855 = vadd.f32 %v1854, 1.0
        %v1856 = vrcp.pop %v1855
        %v1857 = vmul.f32 %v1855, %v1856
        %v1858 = vsub.f32 1.0, %v1857
        %v1859 = vmul.f32 %v1856, %v1858
        %v1860 = vadd.f32 %v1856, %v1859
        %vm1861 = vweird.f32 %v1855
        %vm1862 = vweird.f32 %v1856
        %vm1863 = vmor %vm1861, %vm1862
        %v1864 = vsel %vm1863, %v1856, %v1860
        %v1865 = vand.u32 2147483647, %v1855
        %vm1866 = vcmp.eq.f32.partialorder %v1865, 8.507059e+37
        %v1867 = vand.u32 %v1855, 2147483648
        %v1868 = vor.u32 1.1754944e-38, %v1867
        %v1869 = vsel %vm1866, %v1868, %v1864
        %v1870 = vmul.f32 1.0, %v1869
        %v1871 = vmul.f32 %v1870, %v1721
        %v1872 = vadd.f32 %v1721, %v1871
        %v1873 = vmul.f32 %v1872, %v1723
        %v1874 = vsel %vm870, %v1873, 0.0
        %1875 = vadd.xlane.f32.xlu0 %v1874
        %v1876 = vpop.xlane.xlu0 %1875
        %v1877 = vmul.f32 %v1872, %v1726
        %v1878 = vsel %vm870, %v1877, 0.0
        %1879 = vadd.xlane.f32.xlu0 %v1878
        %v1880 = vpop.xlane.xlu0 %1879
        %v1881 = vmul.f32 %v1872, %v1729
        %v1882 = vsel %vm870, %v1881, 0.0
        %1883 = vadd.xlane.f32.xlu0 %v1882
        %v1884 = vpop.xlane.xlu0 %1883
        %v1885 = vadd.f32 %v1845, %v1876
        %v1886 = vadd.f32 %v1846, %v1880
        %v1887 = vsub.f32 %v1876, %v1884
        %v1888 = vmax.f32 %v1848, %v1887
        %vm1889 = vcmask 7168
        %v1890 = vsel %vm1889, %v1885, %v1886
        %vm1891 = vcmask 15360
        %v1892 = vsel %vm1891, %v1890, %v1888
        %vm1893 = vcmask 23552
        %1894 = vst.msk [vmem:[%s858] sm:$0xff] %vm1893, %v1892
        %p1895 = scmp.lt.s32.totalorder %s38, 1
        %s1896 = scalar_select %p1895, %s38, 1
        %s1897 = smul.addr %s1896, 8
        %s1898 = scalar_lea.vmem %s18, %s1897
        // Predicated region
        $region182: #{tpu_custom_call.1} parent=128 // pred_check
          %p1899 = pneg %p449
        $region183: #{tpu_custom_call.1} parent=128 // pred_check_branch
          %1901 = sbr.rel (%p1899) target = $region185
        $region184: #{tpu_custom_call.1} parent=128 // pred_region
          _
        $region185: #{tpu_custom_call.1} parent=128 // pred_fallthru
          _
      $region129: #{tpu_custom_call.1} parent=5 // pred_fallthru
        _
      %p1902 = scmp.le.s32.totalorder 2, %s33
      // Predicated region
      $region186: #{tpu_custom_call.1} parent=5 // pred_check
        %p1903 = pneg %p1902
      $region187: #{tpu_custom_call.1} parent=5 // pred_check_branch
        %1905 = sbr.rel (%p1903) target = $region189
      $region188: #{tpu_custom_call.1} parent=5 // pred_region
        %s1906 = ssub.s32 %s33, 2
        // Predicated region
        $region190: #{tpu_custom_call.1} parent=188 // pred_check
          %p1907 = pneg %p455
        $region191: #{tpu_custom_call.1} parent=188 // pred_check_branch
          %1909 = sbr.rel (%p1907) target = $region193
        $region192: #{tpu_custom_call.1} parent=188 // pred_region
          %p1910 = scmp.lt.s32.totalorder %s39, 1
          %s1911 = scalar_select %p1910, %s39, 1
          %s1912 = smul.addr %s1911, 8
          %s1913 = scalar_lea.vmem %s18, %s1912
        $region193: #{tpu_custom_call.1} parent=188 // pred_fallthru
          _
      $region189: #{tpu_custom_call.1} parent=5 // pred_fallthru
        _
    $region6: #{tpu_custom_call.1} parent=1 // loop_footer
      %s37 = sadd.s32 1, %s33
    $region7: #{tpu_custom_call.1} parent=1 // loop_footer_branch
      %32 = sbr.rel target = $region3
    $region8: #{tpu_custom_call.1} parent=1 // loop_exit
      _
    %1914 = vsyncpa [#allocation3], 1
    %s1915 = scalar_lea.sflag [#allocation3], 1
    %1916 = vsyncpa %s1915, 1
    %1917 = vsyncpa [#allocation5], 1
    %1918 = vsyncpa [#allocation8], 1
    %1919 = vsyncpa [#allocation11], 1
    %1920 = vsyncpa [#allocation14], 1
    %1921 = vsyncpa [#allocation17], 1
    %1922 = vsyncpa [#allocation20], 1

</llo_original>
